<compile_context>
chip_gen: v7x
topology: tpu7x:2x2x1
jax: 0.10.0
libtpu: 0.0.40
codegen_flags: <defaults>
</compile_context>

<pallas_src>
import functools

import jax
import jax.numpy as jnp
from jax import lax
from jax.experimental import pallas as pl
from jax.experimental.pallas import tpu as pltpu


def _round_up(v, m):
    return (v + m - 1) // m * m


def _vmem_capacity_bytes():
    try:
        return int(pltpu.get_tpu_info().vmem_capacity_bytes)
    except Exception:
        return 64 * 1024 * 1024          # conservative: v7x per-TC VMEM


def _feature_align():
    # 256-wide slabs keep the 2x256x256 MXUs (v6e/v7x) fully fed; v5e-class
    # parts have 128x128 MXUs so 128 alignment is already optimal there.
    try:
        kind = jax.devices()[0].device_kind.lower()
        if any(t in kind for t in ("v5 lite", "v5e", "v4", "v3", "v2")):
            return 128
    except Exception:
        pass
    return 256


def _footprint_bytes(tile_m, tile_h, n_h, Ep, Pp, dtb):
    w_buf = 1 if n_h == 1 else 2                      # resident vs streamed weights
    return (2 * tile_m * (Ep + Pp) * dtb              # x / out tiles (double-buffered)
            + w_buf * (Ep + Pp) * tile_h * dtb        # W1 / W2 blocks
            + w_buf * tile_h * 4 + 3 * Pp * 4         # b1 / b2 / gamma / beta (f32)
            + tile_m * Pp * 4                         # f32 accumulator scratch
            + tile_m * (tile_h + 2 * Pp) * 4)         # f32 h / y temporaries


def prepare_adapter_params(w1, b1, w2, b2, gamma, beta, *, eps=1e-5,
                           compute_dtype=jnp.bfloat16):
    """Pad / cast the adapter parameters ONCE (hoisted out of the forward)."""
    E, H = w1.shape
    P = w2.shape[1]
    align = _feature_align()
    Ep = _round_up(E, align)
    Pp = _round_up(P, align)
    dtb = jnp.dtype(compute_dtype).itemsize
    budget = _vmem_capacity_bytes() - 8 * 1024 * 1024

    # Keep weights fully resident (single H slab) when they fit the per-core
    # VMEM budget; otherwise stream H slabs (K-loop over the hidden dim).
    tile_h = _round_up(H, align)
    while (tile_h > 4 * align and
           _footprint_bytes(512, tile_h, _round_up(H, tile_h) // tile_h,
                            Ep, Pp, dtb) > budget):
        tile_h = _round_up(tile_h // 2, align)
    Hp = _round_up(H, tile_h)

    f32 = jnp.float32
    return dict(
        w1=jnp.pad(w1.astype(compute_dtype), ((0, Ep - E), (0, Hp - H))),
        b1=jnp.pad(b1.astype(f32).reshape(1, H), ((0, 0), (0, Hp - H))),
        w2=jnp.pad(w2.astype(compute_dtype), ((0, Hp - H), (0, Pp - P))),
        b2=jnp.pad(b2.astype(f32).reshape(1, P), ((0, 0), (0, Pp - P))),
        gamma=jnp.pad(gamma.astype(f32).reshape(1, P), ((0, 0), (0, Pp - P))),
        beta=jnp.pad(beta.astype(f32).reshape(1, P), ((0, 0), (0, Pp - P))),
        dims=(E, H, P), padded=(Ep, Hp, Pp), tile_h=int(tile_h),
        eps=float(eps), compute_dtype=compute_dtype,
    )


def _adapter_kernel(x_ref, w1_ref, b1_ref, w2_ref, b2_ref, g_ref, beta_ref,
                    o_ref, acc_ref, *, eps, p_real):
    # x: [tm, Ep] bf16   W1: [Ep, th] bf16   b1: [1, th] f32
    # W2: [th, Pp] bf16  b2/gamma/beta: [1, Pp] f32   o: [tm, Pp]   acc: f32
    h_idx = pl.program_id(1)

    @pl.when(h_idx == 0)
    def _():
        acc_ref[...] = jnp.zeros_like(acc_ref)

    # Linear1 (current H slab) + ReLU: MXU bf16 x bf16 -> f32, VPU epilogue,
    # then back to bf16 for the second MXU pass (intentional bf16 inference).
    h = jnp.dot(x_ref[...], w1_ref[...], preferred_element_type=jnp.float32)
    h = jnp.maximum(h + b1_ref[...], 0.0).astype(w2_ref.dtype)

    # Linear2 partial sum (MXU, f32 accumulation across H slabs).
    acc_ref[...] += jnp.dot(h, w2_ref[...], preferred_element_type=jnp.float32)

    @pl.when(h_idx == pl.num_programs(1) - 1)
    def _():
        y = acc_ref[...] + b2_ref[...]
        # LayerNorm over the real feature dim (biased variance, PyTorch
        # semantics).  Padded lanes of y are exactly zero (zero-padded W2
        # columns / b2 lanes), so full-width sums equal real-width sums and
        # E[y^2] - mu^2 needs no lane mask.
        inv_p = jnp.float32(1.0 / p_real)
        mu = jnp.sum(y, axis=-1, keepdims=True) * inv_p
        var = jnp.maximum(
            jnp.sum(y * y, axis=-1, keepdims=True) * inv_p - mu * mu, 0.0)
        ln = (y - mu) * lax.rsqrt(var + eps) * g_ref[...] + beta_ref[...]
        # Residual.  Padded output lanes stay exactly 0 (y = 0, gamma/beta = 0).
        o_ref[...] = (y + ln).astype(o_ref.dtype)


def visual_adapter(x, params, *, tile_m=512, single_buffer_weights=True):
    """x: [B, S, E] -> [B, S, P]  (fused Linear-ReLU-Linear-LayerNorm-residual)."""
    B, S, E_in = x.shape
    E, H, P = params["dims"]
    Ep, Hp, Pp = params["padded"]
    tile_h = params["tile_h"]
    eps = params["eps"]
    cdt = params["compute_dtype"]
    assert E_in == E
    dtb = jnp.dtype(cdt).itemsize

    M = B * S
    n_h = Hp // tile_h
    budget = _vmem_capacity_bytes() - 8 * 1024 * 1024

    # Row tiling: big tiles amortize per-grid-step overhead and keep the out
    # store lane-dense; clamp for tiny inputs and shrink to fit VMEM.
    tile_m = min(tile_m, _round_up(M, 16))
    while tile_m > 64 and _footprint_bytes(tile_m, tile_h, n_h, Ep, Pp,
                                           dtb) > budget:
        tile_m //= 2
    Mp = _round_up(M, tile_m)
    n_m = Mp // tile_m

    # Activations are padded per call (cheap); weights were pre-padded once.
    x2 = jnp.pad(x.reshape(M, E).astype(cdt), ((0, Mp - M), (0, Ep - E)))

    needed = _footprint_bytes(tile_m, tile_h, n_h, Ep, Pp, dtb)
    vmem_limit = int(min(budget + 4 * 1024 * 1024,
                         max(needed + (needed >> 2), 32 * 1024 * 1024)))

    # Constant-index operands are single-buffered; W1/W2/b1 keep the default
    # double-buffering only when they are streamed over the H axis.
    res_mode = pl.Buffered(1) if single_buffer_weights else None
    w_mode = res_mode if n_h == 1 else None

    weight_reads = 1 if n_h == 1 else n_m
    cost = pl.CostEstimate(
        flops=int(2 * Mp * (Ep * Hp + Hp * Pp)),
        transcendentals=int(Mp),
        bytes_accessed=int(Mp * (Ep + Pp) * dtb
                           + weight_reads * (Ep * Hp + Hp * Pp) * dtb),
    )

    out = pl.pallas_call(
        functools.partial(_adapter_kernel, eps=eps, p_real=P),
        out_shape=jax.ShapeDtypeStruct((Mp, Pp), x.dtype),
        grid_spec=pltpu.PrefetchScalarGridSpec(
            num_scalar_prefetch=0,
            grid=(n_m, n_h),
            in_specs=[
                pl.BlockSpec((tile_m, Ep), lambda i, h: (i, 0)),     # x tile
                pl.BlockSpec((Ep, tile_h), lambda i, h: (0, h),
                             pipeline_mode=w_mode),                  # W1
                pl.BlockSpec((1, tile_h), lambda i, h: (0, h),
                             pipeline_mode=w_mode),                  # b1 (f32)
                pl.BlockSpec((tile_h, Pp), lambda i, h: (h, 0),
                             pipeline_mode=w_mode),                  # W2
                pl.BlockSpec((1, Pp), lambda i, h: (0, 0),
                             pipeline_mode=res_mode),                # b2 (f32)
                pl.BlockSpec((1, Pp), lambda i, h: (0, 0),
                             pipeline_mode=res_mode),                # gamma
                pl.BlockSpec((1, Pp), lambda i, h: (0, 0),
                             pipeline_mode=res_mode),                # beta
            ],
            out_specs=pl.BlockSpec((tile_m, Pp), lambda i, h: (i, 0)),
            scratch_shapes=[pltpu.VMEM((tile_m, Pp), jnp.float32)],
        ),
        compiler_params=pltpu.CompilerParams(
            dimension_semantics=("parallel", "arbitrary"),
            vmem_limit_bytes=vmem_limit),
        cost_estimate=cost,
    )(x2, params["w1"], params["b1"], params["w2"], params["b2"],
      params["gamma"], params["beta"])

    return out[:M, :P].reshape(B, S, P)


def _reference_adapter(x, w1, b1, w2, b2, gamma, beta, eps=1e-5):
    xf = x.astype(jnp.float32)
    h = jnp.maximum(xf @ w1.astype(jnp.float32) + b1.astype(jnp.float32), 0.0)
    y = h @ w2.astype(jnp.float32) + b2.astype(jnp.float32)
    mu = jnp.mean(y, axis=-1, keepdims=True)
    var = jnp.mean((y - mu) ** 2, axis=-1, keepdims=True)
    ln = (y - mu) * lax.rsqrt(var + eps) * gamma.astype(jnp.float32) \
         + beta.astype(jnp.float32)
    return (y + ln).astype(x.dtype)


if __name__ == "__main__":
    # Small shapes consistent with the module's forward:
    #   x       : synthetic last_hidden_state [B, S, encoder_dim] in bfloat16
    #             (matching the explicit .to(dtype=torch.bfloat16) in forward)
    #   adapter : encoder_dim -> hidden_dim(=4*project_dim) -> project_dim
    B, S = 2, 8
    ENCODER_DIM = 32      # stands in for 768
    PROJECT_DIM = 16
    HIDDEN_DIM = PROJECT_DIM * 4

    key = jax.random.PRNGKey(0)
    kx, k1, k2, k3, k4 = jax.random.split(key, 5)

    x = jax.random.normal(kx, (B, S, ENCODER_DIM), dtype=jnp.float32)
    x = x.astype(jnp.bfloat16)

    # Deterministic parameter init (synthetic, not a checkpoint).
    w1 = (jax.random.normal(k1, (ENCODER_DIM, HIDDEN_DIM), jnp.float32)
          * (1.0 / jnp.sqrt(ENCODER_DIM))).astype(jnp.bfloat16)
    b1 = (0.01 * jax.random.normal(k2, (HIDDEN_DIM,), jnp.float32)
          ).astype(jnp.bfloat16)
    w2 = (jax.random.normal(k3, (HIDDEN_DIM, PROJECT_DIM), jnp.float32)
          * (1.0 / jnp.sqrt(HIDDEN_DIM))).astype(jnp.bfloat16)
    b2 = (0.01 * jax.random.normal(k4, (PROJECT_DIM,), jnp.float32)
          ).astype(jnp.bfloat16)
    gamma = jnp.ones((PROJECT_DIM,), jnp.float32)     # nn.LayerNorm defaults
    beta = jnp.zeros((PROJECT_DIM,), jnp.float32)

    # Pad / cast the adapter parameters once (hoisted out of the forward path);
    # the jitted forward closes over the padded params as constants.
    params = prepare_adapter_params(w1, b1, w2, b2, gamma, beta)

    def run(single_buffer):
        fwd = jax.jit(lambda xx: visual_adapter(
            xx, params, single_buffer_weights=single_buffer))
        return jax.block_until_ready(fwd(x))

    try:
        out = run(True)
    except Exception:
        # Fallback for JAX builds without BlockSpec pipeline_mode support.
        out = run(False)

    # Correctness check against a pure-JAX reference of the adapter math.
    ref = _reference_adapter(x.reshape(B * S, ENCODER_DIM),
                             w1, b1, w2, b2, gamma, beta).reshape(
                                 B, S, PROJECT_DIM)
    err = jnp.max(jnp.abs(out.astype(jnp.float32) - ref.astype(jnp.float32)))
    assert out.shape == (B, S, PROJECT_DIM)
    assert out.dtype == jnp.bfloat16
    assert float(err) < 5e-2, f"max abs err too large: {float(err)}"

    print("KERNEL_OK")
</pallas_src>

<mosaic_0001>
module attributes {stable_mosaic.version = 11 : i64} {
  func.func @_adapter_kernel(%arg0: i32, %arg1: i32, %arg2: memref<16x256xbf16, #tpu.memory_space<vmem>>, %arg3: memref<256x256xbf16, #tpu.memory_space<vmem>>, %arg4: memref<1x256xf32, #tpu.memory_space<vmem>>, %arg5: memref<256x256xbf16, #tpu.memory_space<vmem>>, %arg6: memref<1x256xf32, #tpu.memory_space<vmem>>, %arg7: memref<1x256xf32, #tpu.memory_space<vmem>>, %arg8: memref<1x256xf32, #tpu.memory_space<vmem>>, %arg9: memref<16x256xbf16, #tpu.memory_space<vmem>>, %arg10: memref<16x256xf32, #tpu.memory_space<vmem>>) attributes {dimension_semantics = [#tpu.dimension_semantics<parallel>, #tpu.dimension_semantics<arbitrary>], iteration_bounds = array<i64: 1, 1>, scalar_prefetch = 0 : i64, scratch_operands = 1 : i64, tpu.core_type = #tpu.core_type<tc>, window_params = [{transform_indices = @transform_0, window_bounds = array<i64: 16, 256>}, {pipeline_mode = #tpu.pipeline_mode<synchronous>, transform_indices = @transform_1, window_bounds = array<i64: 256, 256>}, {pipeline_mode = #tpu.pipeline_mode<synchronous>, transform_indices = @transform_2, window_bounds = array<i64: 1, 256>}, {pipeline_mode = #tpu.pipeline_mode<synchronous>, transform_indices = @transform_3, window_bounds = array<i64: 256, 256>}, {pipeline_mode = #tpu.pipeline_mode<synchronous>, transform_indices = @transform_4, window_bounds = array<i64: 1, 256>}, {pipeline_mode = #tpu.pipeline_mode<synchronous>, transform_indices = @transform_5, window_bounds = array<i64: 1, 256>}, {pipeline_mode = #tpu.pipeline_mode<synchronous>, transform_indices = @transform_6, window_bounds = array<i64: 1, 256>}, {transform_indices = @transform_7, window_bounds = array<i64: 16, 256>}]} {
    %c0_i32 = arith.constant 0 : i32
    %0 = arith.cmpi eq, %arg1, %c0_i32 : i32
    %1 = arith.extui %0 : i1 to i32
    %c0_i32_0 = arith.constant 0 : i32
    %2 = arith.cmpi ne, %1, %c0_i32_0 : i32
    scf.if %2 {
      %cst_16 = arith.constant 0.000000e+00 : f32
      %20 = vector.broadcast %cst_16 : f32 to vector<16x256xf32>
      %c0_17 = arith.constant 0 : index
      %c0_18 = arith.constant 0 : index
      %21 = vector.load %arg10[%c0_17, %c0_18] : memref<16x256xf32, #tpu.memory_space<vmem>>, vector<16x256xf32>
      tpu.vector_store %arg10[%c0_17, %c0_18], %20 {strides = array<i32>} : memref<16x256xf32, #tpu.memory_space<vmem>>, vector<16x256xf32>,
    } else {
    }
    %c0 = arith.constant 0 : index
    %c0_1 = arith.constant 0 : index
    %3 = vector.load %arg2[%c0, %c0_1] : memref<16x256xbf16, #tpu.memory_space<vmem>>, vector<16x256xbf16>
    %c0_2 = arith.constant 0 : index
    %c0_3 = arith.constant 0 : index
    %4 = vector.load %arg3[%c0_2, %c0_3] : memref<256x256xbf16, #tpu.memory_space<vmem>>, vector<256x256xbf16>
    %cst = arith.constant dense<0.000000e+00> : vector<16x256xf32>
    %5 = tpu.matmul %3, %4, %cst {dimension_numbers = #tpu.dot_dimension_numbers<[1], [0], [0], [1], [0, 0, 1, 1], [], []>} : vector<16x256xbf16>, vector<256x256xbf16>, vector<16x256xf32> -> vector<16x256xf32>
    %c0_4 = arith.constant 0 : index
    %c0_5 = arith.constant 0 : index
    %6 = vector.load %arg4[%c0_4, %c0_5] : memref<1x256xf32, #tpu.memory_space<vmem>>, vector<1x256xf32>
    %7 = vector.broadcast %6 : vector<1x256xf32> to vector<16x256xf32>
    %8 = arith.addf %5, %7 : vector<16x256xf32>
    %cst_6 = arith.constant 0.000000e+00 : f32
    %9 = vector.broadcast %cst_6 : f32 to vector<16x256xf32>
    %10 = arith.maximumf %8, %9 : vector<16x256xf32>
    %11 = arith.truncf %10 : vector<16x256xf32> to vector<16x256xbf16>
    %c0_7 = arith.constant 0 : index
    %c0_8 = arith.constant 0 : index
    %12 = vector.load %arg10[%c0_7, %c0_8] : memref<16x256xf32, #tpu.memory_space<vmem>>, vector<16x256xf32>
    %c0_9 = arith.constant 0 : index
    %c0_10 = arith.constant 0 : index
    %13 = vector.load %arg5[%c0_9, %c0_10] : memref<256x256xbf16, #tpu.memory_space<vmem>>, vector<256x256xbf16>
    %cst_11 = arith.constant dense<0.000000e+00> : vector<16x256xf32>
    %14 = tpu.matmul %11, %13, %cst_11 {dimension_numbers = #tpu.dot_dimension_numbers<[1], [0], [0], [1], [0, 0, 1, 1], [], []>} : vector<16x256xbf16>, vector<256x256xbf16>, vector<16x256xf32> -> vector<16x256xf32>
    %15 = arith.addf %12, %14 : vector<16x256xf32>
    %c0_12 = arith.constant 0 : index
    %c0_13 = arith.constant 0 : index
    %16 = vector.load %arg10[%c0_12, %c0_13] : memref<16x256xf32, #tpu.memory_space<vmem>>, vector<16x256xf32>
    tpu.vector_store %arg10[%c0_12, %c0_13], %15 {strides = array<i32>} : memref<16x256xf32, #tpu.memory_space<vmem>>, vector<16x256xf32>,
    %c0_i32_14 = arith.constant 0 : i32
    %17 = arith.cmpi eq, %arg1, %c0_i32_14 : i32
    %18 = arith.extui %17 : i1 to i32
    %c0_i32_15 = arith.constant 0 : i32
    %19 = arith.cmpi ne, %18, %c0_i32_15 : i32
    scf.if %19 {
      %c0_16 = arith.constant 0 : index
      %c0_17 = arith.constant 0 : index
      %20 = vector.load %arg10[%c0_16, %c0_17] : memref<16x256xf32, #tpu.memory_space<vmem>>, vector<16x256xf32>
      %c0_18 = arith.constant 0 : index
      %c0_19 = arith.constant 0 : index
      %21 = vector.load %arg6[%c0_18, %c0_19] : memref<1x256xf32, #tpu.memory_space<vmem>>, vector<1x256xf32>
      %22 = vector.broadcast %21 : vector<1x256xf32> to vector<16x256xf32>
      %23 = arith.addf %20, %22 : vector<16x256xf32>
      %cst_20 = arith.constant dense<0.000000e+00> : vector<16xf32>
      %24 = vector.multi_reduction <add>, %23, %cst_20 [1] : vector<16x256xf32> to vector<16xf32>
      %25 = vector.shape_cast %24 : vector<16xf32> to vector<16x1xf32>
      %cst_21 = arith.constant 6.250000e-02 : f32
      %26 = vector.broadcast %cst_21 : f32 to vector<16x1xf32>
      %27 = arith.mulf %25, %26 : vector<16x1xf32>
      %28 = arith.mulf %23, %23 : vector<16x256xf32>
      %cst_22 = arith.constant dense<0.000000e+00> : vector<16xf32>
      %29 = vector.multi_reduction <add>, %28, %cst_22 [1] : vector<16x256xf32> to vector<16xf32>
      %30 = vector.shape_cast %29 : vector<16xf32> to vector<16x1xf32>
      %cst_23 = arith.constant 6.250000e-02 : f32
      %31 = vector.broadcast %cst_23 : f32 to vector<16x1xf32>
      %32 = arith.mulf %30, %31 : vector<16x1xf32>
      %33 = arith.mulf %27, %27 : vector<16x1xf32>
      %34 = arith.subf %32, %33 : vector<16x1xf32>
      %cst_24 = arith.constant 0.000000e+00 : f32
      %35 = vector.broadcast %cst_24 : f32 to vector<16x1xf32>
      %36 = arith.maximumf %34, %35 : vector<16x1xf32>
      %37 = vector.broadcast %27 : vector<16x1xf32> to vector<16x256xf32>
      %38 = arith.subf %23, %37 : vector<16x256xf32>
      %cst_25 = arith.constant 9.99999974E-6 : f32
      %39 = vector.broadcast %cst_25 : f32 to vector<16x1xf32>
      %40 = arith.addf %36, %39 : vector<16x1xf32>
      %41 = math.rsqrt %40 : vector<16x1xf32>
      %42 = vector.broadcast %41 : vector<16x1xf32> to vector<16x256xf32>
      %43 = arith.mulf %38, %42 : vector<16x256xf32>
      %c0_26 = arith.constant 0 : index
      %c0_27 = arith.constant 0 : index
      %44 = vector.load %arg7[%c0_26, %c0_27] : memref<1x256xf32, #tpu.memory_space<vmem>>, vector<1x256xf32>
      %45 = vector.broadcast %44 : vector<1x256xf32> to vector<16x256xf32>
      %46 = arith.mulf %43, %45 : vector<16x256xf32>
      %c0_28 = arith.constant 0 : index
      %c0_29 = arith.constant 0 : index
      %47 = vector.load %arg8[%c0_28, %c0_29] : memref<1x256xf32, #tpu.memory_space<vmem>>, vector<1x256xf32>
      %48 = vector.broadcast %47 : vector<1x256xf32> to vector<16x256xf32>
      %49 = arith.addf %46, %48 : vector<16x256xf32>
      %50 = arith.addf %23, %49 : vector<16x256xf32>
      %51 = arith.truncf %50 : vector<16x256xf32> to vector<16x256xbf16>
      %c0_30 = arith.constant 0 : index
      %c0_31 = arith.constant 0 : index
      %52 = vector.load %arg9[%c0_30, %c0_31] : memref<16x256xbf16, #tpu.memory_space<vmem>>, vector<16x256xbf16>
      tpu.vector_store %arg9[%c0_30, %c0_31], %51 {strides = array<i32>} : memref<16x256xbf16, #tpu.memory_space<vmem>>, vector<16x256xbf16>,
    } else {
    }
    return
  }
  func.func @transform_0(%arg0: i32, %arg1: i32) -> (i32, i32) {
    %c0_i32 = arith.constant 0 : i32
    %c0_i32_0 = arith.constant 0 : i32
    return %arg0, %c0_i32 : i32, i32
  }
  func.func @transform_1(%arg0: i32, %arg1: i32) -> (i32, i32) {
    %c0_i32 = arith.constant 0 : i32
    %c0_i32_0 = arith.constant 0 : i32
    return %c0_i32, %arg1 : i32, i32
  }
  func.func @transform_2(%arg0: i32, %arg1: i32) -> (i32, i32) {
    %c0_i32 = arith.constant 0 : i32
    %c0_i32_0 = arith.constant 0 : i32
    return %c0_i32, %arg1 : i32, i32
  }
  func.func @transform_3(%arg0: i32, %arg1: i32) -> (i32, i32) {
    %c0_i32 = arith.constant 0 : i32
    %c0_i32_0 = arith.constant 0 : i32
    return %arg1, %c0_i32 : i32, i32
  }
  func.func @transform_4(%arg0: i32, %arg1: i32) -> (i32, i32) {
    %c0_i32 = arith.constant 0 : i32
    %c0_i32_0 = arith.constant 0 : i32
    %c0_i32_1 = arith.constant 0 : i32
    return %c0_i32, %c0_i32_0 : i32, i32
  }
  func.func @transform_5(%arg0: i32, %arg1: i32) -> (i32, i32) {
    %c0_i32 = arith.constant 0 : i32
    %c0_i32_0 = arith.constant 0 : i32
    %c0_i32_1 = arith.constant 0 : i32
    return %c0_i32, %c0_i32_0 : i32, i32
  }
  func.func @transform_6(%arg0: i32, %arg1: i32) -> (i32, i32) {
    %c0_i32 = arith.constant 0 : i32
    %c0_i32_0 = arith.constant 0 : i32
    %c0_i32_1 = arith.constant 0 : i32
    return %c0_i32, %c0_i32_0 : i32, i32
  }
  func.func @transform_7(%arg0: i32, %arg1: i32) -> (i32, i32) {
    %c0_i32 = arith.constant 0 : i32
    %c0_i32_0 = arith.constant 0 : i32
    return %arg0, %c0_i32 : i32, i32
  }
}

module attributes {stable_mosaic.version = 11 : i64} {
  func.func @_adapter_kernel(%arg0: i32, %arg1: i32, %arg2: memref<16x256xbf16, #tpu.memory_space<vmem>>, %arg3: memref<256x256xbf16, #tpu.memory_space<vmem>>, %arg4: memref<1x256xf32, #tpu.memory_space<vmem>>, %arg5: memref<256x256xbf16, #tpu.memory_space<vmem>>, %arg6: memref<1x256xf32, #tpu.memory_space<vmem>>, %arg7: memref<1x256xf32, #tpu.memory_space<vmem>>, %arg8: memref<1x256xf32, #tpu.memory_space<vmem>>, %arg9: memref<16x256xbf16, #tpu.memory_space<vmem>>, %arg10: memref<16x256xf32, #tpu.memory_space<vmem>>) attributes {dimension_semantics = [#tpu.dimension_semantics<parallel>, #tpu.dimension_semantics<arbitrary>], iteration_bounds = array<i64: 1, 1>, scalar_prefetch = 0 : i64, scratch_operands = 1 : i64, tpu.core_type = #tpu.core_type<tc>, window_params = [{transform_indices = @transform_0, window_bounds = array<i64: 16, 256>}, {transform_indices = @transform_1, window_bounds = array<i64: 256, 256>}, {transform_indices = @transform_2, window_bounds = array<i64: 1, 256>}, {transform_indices = @transform_3, window_bounds = array<i64: 256, 256>}, {pipeline_mode = #tpu.pipeline_mode<synchronous>, transform_indices = @transform_4, window_bounds = array<i64: 1, 256>}, {pipeline_mode = #tpu.pipeline_mode<synchronous>, transform_indices = @transform_5, window_bounds = array<i64: 1, 256>}, {pipeline_mode = #tpu.pipeline_mode<synchronous>, transform_indices = @transform_6, window_bounds = array<i64: 1, 256>}, {transform_indices = @transform_7, window_bounds = array<i64: 16, 256>}]} {
    %c0_i32 = arith.constant 0 : i32
    %0 = arith.cmpi eq, %arg1, %c0_i32 : i32
    %1 = arith.extui %0 : i1 to i32
    %c0_i32_0 = arith.constant 0 : i32
    %2 = arith.cmpi ne, %1, %c0_i32_0 : i32
    scf.if %2 {
      %cst_16 = arith.constant 0.000000e+00 : f32
      %20 = vector.broadcast %cst_16 : f32 to vector<16x256xf32>
      %c0_17 = arith.constant 0 : index
      %c0_18 = arith.constant 0 : index
      %21 = vector.load %arg10[%c0_17, %c0_18] : memref<16x256xf32, #tpu.memory_space<vmem>>, vector<16x256xf32>
      tpu.vector_store %arg10[%c0_17, %c0_18], %20 {strides = array<i32>} : memref<16x256xf32, #tpu.memory_space<vmem>>, vector<16x256xf32>,
    } else {
    }
    %c0 = arith.constant 0 : index
    %c0_1 = arith.constant 0 : index
    %3 = vector.load %arg2[%c0, %c0_1] : memref<16x256xbf16, #tpu.memory_space<vmem>>, vector<16x256xbf16>
    %c0_2 = arith.constant 0 : index
    %c0_3 = arith.constant 0 : index
    %4 = vector.load %arg3[%c0_2, %c0_3] : memref<256x256xbf16, #tpu.memory_space<vmem>>, vector<256x256xbf16>
    %cst = arith.constant dense<0.000000e+00> : vector<16x256xf32>
    %5 = tpu.matmul %3, %4, %cst {dimension_numbers = #tpu.dot_dimension_numbers<[1], [0], [0], [1], [0, 0, 1, 1], [], []>} : vector<16x256xbf16>, vector<256x256xbf16>, vector<16x256xf32> -> vector<16x256xf32>
    %c0_4 = arith.constant 0 : index
    %c0_5 = arith.constant 0 : index
    %6 = vector.load %arg4[%c0_4, %c0_5] : memref<1x256xf32, #tpu.memory_space<vmem>>, vector<1x256xf32>
    %7 = vector.broadcast %6 : vector<1x256xf32> to vector<16x256xf32>
    %8 = arith.addf %5, %7 : vector<16x256xf32>
    %cst_6 = arith.constant 0.000000e+00 : f32
    %9 = vector.broadcast %cst_6 : f32 to vector<16x256xf32>
    %10 = arith.maximumf %8, %9 : vector<16x256xf32>
    %11 = arith.truncf %10 : vector<16x256xf32> to vector<16x256xbf16>
    %c0_7 = arith.constant 0 : index
    %c0_8 = arith.constant 0 : index
    %12 = vector.load %arg10[%c0_7, %c0_8] : memref<16x256xf32, #tpu.memory_space<vmem>>, vector<16x256xf32>
    %c0_9 = arith.constant 0 : index
    %c0_10 = arith.constant 0 : index
    %13 = vector.load %arg5[%c0_9, %c0_10] : memref<256x256xbf16, #tpu.memory_space<vmem>>, vector<256x256xbf16>
    %cst_11 = arith.constant dense<0.000000e+00> : vector<16x256xf32>
    %14 = tpu.matmul %11, %13, %cst_11 {dimension_numbers = #tpu.dot_dimension_numbers<[1], [0], [0], [1], [0, 0, 1, 1], [], []>} : vector<16x256xbf16>, vector<256x256xbf16>, vector<16x256xf32> -> vector<16x256xf32>
    %15 = arith.addf %12, %14 : vector<16x256xf32>
    %c0_12 = arith.constant 0 : index
    %c0_13 = arith.constant 0 : index
    %16 = vector.load %arg10[%c0_12, %c0_13] : memref<16x256xf32, #tpu.memory_space<vmem>>, vector<16x256xf32>
    tpu.vector_store %arg10[%c0_12, %c0_13], %15 {strides = array<i32>} : memref<16x256xf32, #tpu.memory_space<vmem>>, vector<16x256xf32>,
    %c0_i32_14 = arith.constant 0 : i32
    %17 = arith.cmpi eq, %arg1, %c0_i32_14 : i32
    %18 = arith.extui %17 : i1 to i32
    %c0_i32_15 = arith.constant 0 : i32
    %19 = arith.cmpi ne, %18, %c0_i32_15 : i32
    scf.if %19 {
      %c0_16 = arith.constant 0 : index
      %c0_17 = arith.constant 0 : index
      %20 = vector.load %arg10[%c0_16, %c0_17] : memref<16x256xf32, #tpu.memory_space<vmem>>, vector<16x256xf32>
      %c0_18 = arith.constant 0 : index
      %c0_19 = arith.constant 0 : index
      %21 = vector.load %arg6[%c0_18, %c0_19] : memref<1x256xf32, #tpu.memory_space<vmem>>, vector<1x256xf32>
      %22 = vector.broadcast %21 : vector<1x256xf32> to vector<16x256xf32>
      %23 = arith.addf %20, %22 : vector<16x256xf32>
      %cst_20 = arith.constant dense<0.000000e+00> : vector<16xf32>
      %24 = vector.multi_reduction <add>, %23, %cst_20 [1] : vector<16x256xf32> to vector<16xf32>
      %25 = vector.shape_cast %24 : vector<16xf32> to vector<16x1xf32>
      %cst_21 = arith.constant 6.250000e-02 : f32
      %26 = vector.broadcast %cst_21 : f32 to vector<16x1xf32>
      %27 = arith.mulf %25, %26 : vector<16x1xf32>
      %28 = arith.mulf %23, %23 : vector<16x256xf32>
      %cst_22 = arith.constant dense<0.000000e+00> : vector<16xf32>
      %29 = vector.multi_reduction <add>, %28, %cst_22 [1] : vector<16x256xf32> to vector<16xf32>
      %30 = vector.shape_cast %29 : vector<16xf32> to vector<16x1xf32>
      %cst_23 = arith.constant 6.250000e-02 : f32
      %31 = vector.broadcast %cst_23 : f32 to vector<16x1xf32>
      %32 = arith.mulf %30, %31 : vector<16x1xf32>
      %33 = arith.mulf %27, %27 : vector<16x1xf32>
      %34 = arith.subf %32, %33 : vector<16x1xf32>
      %cst_24 = arith.constant 0.000000e+00 : f32
      %35 = vector.broadcast %cst_24 : f32 to vector<16x1xf32>
      %36 = arith.maximumf %34, %35 : vector<16x1xf32>
      %37 = vector.broadcast %27 : vector<16x1xf32> to vector<16x256xf32>
      %38 = arith.subf %23, %37 : vector<16x256xf32>
      %cst_25 = arith.constant 9.99999974E-6 : f32
      %39 = vector.broadcast %cst_25 : f32 to vector<16x1xf32>
      %40 = arith.addf %36, %39 : vector<16x1xf32>
      %41 = math.rsqrt %40 : vector<16x1xf32>
      %42 = vector.broadcast %41 : vector<16x1xf32> to vector<16x256xf32>
      %43 = arith.mulf %38, %42 : vector<16x256xf32>
      %c0_26 = arith.constant 0 : index
      %c0_27 = arith.constant 0 : index
      %44 = vector.load %arg7[%c0_26, %c0_27] : memref<1x256xf32, #tpu.memory_space<vmem>>, vector<1x256xf32>
      %45 = vector.broadcast %44 : vector<1x256xf32> to vector<16x256xf32>
      %46 = arith.mulf %43, %45 : vector<16x256xf32>
      %c0_28 = arith.constant 0 : index
      %c0_29 = arith.constant 0 : index
      %47 = vector.load %arg8[%c0_28, %c0_29] : memref<1x256xf32, #tpu.memory_space<vmem>>, vector<1x256xf32>
      %48 = vector.broadcast %47 : vector<1x256xf32> to vector<16x256xf32>
      %49 = arith.addf %46, %48 : vector<16x256xf32>
      %50 = arith.addf %23, %49 : vector<16x256xf32>
      %51 = arith.truncf %50 : vector<16x256xf32> to vector<16x256xbf16>
      %c0_30 = arith.constant 0 : index
      %c0_31 = arith.constant 0 : index
      %52 = vector.load %arg9[%c0_30, %c0_31] : memref<16x256xbf16, #tpu.memory_space<vmem>>, vector<16x256xbf16>
      tpu.vector_store %arg9[%c0_30, %c0_31], %51 {strides = array<i32>} : memref<16x256xbf16, #tpu.memory_space<vmem>>, vector<16x256xbf16>,
    } else {
    }
    return
  }
  func.func @transform_0(%arg0: i32, %arg1: i32) -> (i32, i32) {
    %c0_i32 = arith.constant 0 : i32
    %c0_i32_0 = arith.constant 0 : i32
    return %arg0, %c0_i32 : i32, i32
  }
  func.func @transform_1(%arg0: i32, %arg1: i32) -> (i32, i32) {
    %c0_i32 = arith.constant 0 : i32
    %c0_i32_0 = arith.constant 0 : i32
    return %c0_i32, %arg1 : i32, i32
  }
  func.func @transform_2(%arg0: i32, %arg1: i32) -> (i32, i32) {
    %c0_i32 = arith.constant 0 : i32
    %c0_i32_0 = arith.constant 0 : i32
    return %c0_i32, %arg1 : i32, i32
  }
  func.func @transform_3(%arg0: i32, %arg1: i32) -> (i32, i32) {
    %c0_i32 = arith.constant 0 : i32
    %c0_i32_0 = arith.constant 0 : i32
    return %arg1, %c0_i32 : i32, i32
  }
  func.func @transform_4(%arg0: i32, %arg1: i32) -> (i32, i32) {
    %c0_i32 = arith.constant 0 : i32
    %c0_i32_0 = arith.constant 0 : i32
    %c0_i32_1 = arith.constant 0 : i32
    return %c0_i32, %c0_i32_0 : i32, i32
  }
  func.func @transform_5(%arg0: i32, %arg1: i32) -> (i32, i32) {
    %c0_i32 = arith.constant 0 : i32
    %c0_i32_0 = arith.constant 0 : i32
    %c0_i32_1 = arith.constant 0 : i32
    return %c0_i32, %c0_i32_0 : i32, i32
  }
  func.func @transform_6(%arg0: i32, %arg1: i32) -> (i32, i32) {
    %c0_i32 = arith.constant 0 : i32
    %c0_i32_0 = arith.constant 0 : i32
    %c0_i32_1 = arith.constant 0 : i32
    return %c0_i32, %c0_i32_0 : i32, i32
  }
  func.func @transform_7(%arg0: i32, %arg1: i32) -> (i32, i32) {
    %c0_i32 = arith.constant 0 : i32
    %c0_i32_0 = arith.constant 0 : i32
    return %arg0, %c0_i32 : i32, i32
  }
}

</mosaic_0001>

<llo_original>
// kernel: _lambda_.1
$region0: #{_lambda_.1}
  #allocation0 [shape = 'u32[]', space=smem, size = 0x4, offset = 0x4, fixed_abs, tag = 'smem constant byte address 0x4 - core index']
  #allocation1 [shape = 'u32[144,128]{1,0:T(1,128)}', space=vmem, size = 0x12000, scoped, tag = 'internal scratch']
  #allocation2 [shape = 'f32[16,256]{1,0:T(8,128)}', space=vmem, size = 0x4000, scoped, tag = 'scratch operand']
  %s0 = inlined_call_operand.vmem [shape: bf16[16,256], index: 0, kind: input, shape index: {}]
  %s1 = inlined_call_operand.vmem [shape: bf16[256,256], index: 1, kind: input, shape index: {}]
  %s2 = inlined_call_operand.vmem [shape: f32[1,256], index: 2, kind: input, shape index: {}]
  %s3 = inlined_call_operand.vmem [shape: bf16[256,256], index: 3, kind: input, shape index: {}]
  %s4 = inlined_call_operand.vmem [shape: f32[1,256], index: 4, kind: input, shape index: {}]
  %s5 = inlined_call_operand.vmem [shape: f32[1,256], index: 5, kind: input, shape index: {}]
  %s6 = inlined_call_operand.vmem [shape: f32[1,256], index: 6, kind: input, shape index: {}]
  %s7 = inlined_call_operand.vmem [shape: bf16[16,256], index: 7, kind: output, shape index: {}]
  %s8 = sld [smem:[#allocation0]]
  $region46: #{_lambda_.1} parent=0
    _
  %s10 = ssub.s32 1, %s8
  %s11 = scalar_select 0, %s10, %s8
  // Predicated region
  $region2: #{_lambda_.1} parent=0 // pred_check
    _
  $region3: #{_lambda_.1} parent=0 // pred_check_branch
    %13 = sbr.rel (0) target = $region5
  $region4: #{_lambda_.1} parent=0 // pred_region
    _
  $region5: #{_lambda_.1} parent=0 // pred_fallthru
    _
  // Predicated region
  $region6: #{_lambda_.1} parent=0 // pred_check
    _
  $region7: #{_lambda_.1} parent=0 // pred_check_branch
    %15 = sbr.rel (0) target = $region9
  $region8: #{_lambda_.1} parent=0 // pred_region
    _
  $region9: #{_lambda_.1} parent=0 // pred_fallthru
    _
  // Predicated region
  $region10: #{_lambda_.1} parent=0 // pred_check
    _
  $region11: #{_lambda_.1} parent=0 // pred_check_branch
    %17 = sbr.rel (0) target = $region13
  $region12: #{_lambda_.1} parent=0 // pred_region
    _
  $region13: #{_lambda_.1} parent=0 // pred_fallthru
    _
  // Predicated region
  $region14: #{_lambda_.1} parent=0 // pred_check
    _
  $region15: #{_lambda_.1} parent=0 // pred_check_branch
    %19 = sbr.rel (0) target = $region17
  $region16: #{_lambda_.1} parent=0 // pred_region
    _
  $region17: #{_lambda_.1} parent=0 // pred_fallthru
    _
  // Predicated region
  $region18: #{_lambda_.1} parent=0 // pred_check
    _
  $region19: #{_lambda_.1} parent=0 // pred_check_branch
    %21 = sbr.rel (0) target = $region21
  $region20: #{_lambda_.1} parent=0 // pred_region
    _
  $region21: #{_lambda_.1} parent=0 // pred_fallthru
    _
  // Predicated region
  $region22: #{_lambda_.1} parent=0 // pred_check
    _
  $region23: #{_lambda_.1} parent=0 // pred_check_branch
    %23 = sbr.rel (0) target = $region25
  $region24: #{_lambda_.1} parent=0 // pred_region
    _
  $region25: #{_lambda_.1} parent=0 // pred_fallthru
    _
  // Predicated region
  $region26: #{_lambda_.1} parent=0 // pred_check
    _
  $region27: #{_lambda_.1} parent=0 // pred_check_branch
    %25 = sbr.rel (0) target = $region29
  $region28: #{_lambda_.1} parent=0 // pred_region
    _
  $region29: #{_lambda_.1} parent=0 // pred_fallthru
    _
  %p26 = scmp.eq.s32.totalorder 0, 0
  // Predicated region
  $region30: #{_lambda_.1} parent=0 // pred_check
    %p27 = pneg %p26
  $region31: #{_lambda_.1} parent=0 // pred_check_branch
    %29 = sbr.rel (%p27) target = $region33
  $region32: #{_lambda_.1} parent=0 // pred_region
    %30 = vst [vmem:[#allocation2] sm:$0xff] 0.0
    %31 = vst [vmem:[#allocation2 + $0x8] sm:$0xff] 0.0
    %32 = vst [vmem:[#allocation2 + $0x10] sm:$0xff] 0.0
    %33 = vst [vmem:[#allocation2 + $0x18] sm:$0xff] 0.0
  $region33: #{_lambda_.1} parent=0 // pred_fallthru
    _
  %v34 = vld [vmem:[%s0] sm:$0xff]
  %v35 = vld [vmem:[%s0 + $0x8] sm:$0xff]
  %v36 = vld [vmem:[%s1] sm:$0xff]
  %v37 = vld [vmem:[%s1 + $0x8] sm:$0xff]
  %v38 = vld [vmem:[%s1 + $0x10] sm:$0xff]
  %v39 = vld [vmem:[%s1 + $0x18] sm:$0xff]
  %v40 = vld [vmem:[%s1 + $0x20] sm:$0xff]
  %v41 = vld [vmem:[%s1 + $0x28] sm:$0xff]
  %v42 = vld [vmem:[%s1 + $0x30] sm:$0xff]
  %v43 = vld [vmem:[%s1 + $0x38] sm:$0xff]
  %v44 = vld [vmem:[%s1 + $0x40] sm:$0xff]
  %v45 = vld [vmem:[%s1 + $0x48] sm:$0xff]
  %v46 = vld [vmem:[%s1 + $0x50] sm:$0xff]
  %v47 = vld [vmem:[%s1 + $0x58] sm:$0xff]
  %v48 = vld [vmem:[%s1 + $0x60] sm:$0xff]
  %v49 = vld [vmem:[%s1 + $0x68] sm:$0xff]
  %v50 = vld [vmem:[%s1 + $0x70] sm:$0xff]
  %v51 = vld [vmem:[%s1 + $0x78] sm:$0xff]
  %v52 = vld [vmem:[%s1 + $0x80] sm:$0xff]
  %v53 = vld [vmem:[%s1 + $0x88] sm:$0xff]
  %v54 = vld [vmem:[%s1 + $0x90] sm:$0xff]
  %v55 = vld [vmem:[%s1 + $0x98] sm:$0xff]
  %v56 = vld [vmem:[%s1 + $0xa0] sm:$0xff]
  %v57 = vld [vmem:[%s1 + $0xa8] sm:$0xff]
  %v58 = vld [vmem:[%s1 + $0xb0] sm:$0xff]
  %v59 = vld [vmem:[%s1 + $0xb8] sm:$0xff]
  %v60 = vld [vmem:[%s1 + $0xc0] sm:$0xff]
  %v61 = vld [vmem:[%s1 + $0xc8] sm:$0xff]
  %v62 = vld [vmem:[%s1 + $0xd0] sm:$0xff]
  %v63 = vld [vmem:[%s1 + $0xd8] sm:$0xff]
  %v64 = vld [vmem:[%s1 + $0xe0] sm:$0xff]
  %v65 = vld [vmem:[%s1 + $0xe8] sm:$0xff]
  %v66 = vld [vmem:[%s1 + $0xf0] sm:$0xff]
  %v67 = vld [vmem:[%s1 + $0xf8] sm:$0xff]
  %v68 = vld [vmem:[%s2] sm:$0x3]
  %v70 = vlaneseq
  %v71 = vshrl.u32 %v70, 7
  %v72 = vsub.s32 0, %v71
  %v73 = vrot.slane %v68, %v72
  %v74 = vlaneseq
  %v75 = vshrl.u32 %v74, 7
  %v76 = vsub.s32 1, %v75
  %v77 = vrot.slane %v68, %v76
  %v82 = vunpack.c.l.b16 %v34
  %v83 = vunpack.c.h.b16 %v34
  %v84 = vunpack.c.l.b16 %v35
  %v85 = vunpack.c.h.b16 %v35
  %v86 = vpack.c.b16 %v84, %v82
  %v87 = vpack.c.b16 %v85, %v83
  %v122 = vunpack.c.l.b16 %v36
  %v123 = vunpack.c.h.b16 %v36
  %v124 = vunpack.c.l.b16 %v37
  %v125 = vunpack.c.h.b16 %v37
  %v126 = vunpack.c.l.b16 %v38
  %v127 = vunpack.c.h.b16 %v38
  %v128 = vunpack.c.l.b16 %v39
  %v129 = vunpack.c.h.b16 %v39
  %v130 = vunpack.c.l.b16 %v40
  %v131 = vunpack.c.h.b16 %v40
  %v132 = vunpack.c.l.b16 %v41
  %v133 = vunpack.c.h.b16 %v41
  %v134 = vunpack.c.l.b16 %v42
  %v135 = vunpack.c.h.b16 %v42
  %v136 = vunpack.c.l.b16 %v43
  %v137 = vunpack.c.h.b16 %v43
  %v138 = vunpack.c.l.b16 %v44
  %v139 = vunpack.c.h.b16 %v44
  %v140 = vunpack.c.l.b16 %v45
  %v141 = vunpack.c.h.b16 %v45
  %v142 = vunpack.c.l.b16 %v46
  %v143 = vunpack.c.h.b16 %v46
  %v144 = vunpack.c.l.b16 %v47
  %v145 = vunpack.c.h.b16 %v47
  %v146 = vunpack.c.l.b16 %v48
  %v147 = vunpack.c.h.b16 %v48
  %v148 = vunpack.c.l.b16 %v49
  %v149 = vunpack.c.h.b16 %v49
  %v150 = vunpack.c.l.b16 %v50
  %v151 = vunpack.c.h.b16 %v50
  %v152 = vunpack.c.l.b16 %v51
  %v153 = vunpack.c.h.b16 %v51
  %v154 = vunpack.c.l.b16 %v52
  %v155 = vunpack.c.h.b16 %v52
  %v156 = vunpack.c.l.b16 %v53
  %v157 = vunpack.c.h.b16 %v53
  %v158 = vunpack.c.l.b16 %v54
  %v159 = vunpack.c.h.b16 %v54
  %v160 = vunpack.c.l.b16 %v55
  %v161 = vunpack.c.h.b16 %v55
  %v162 = vunpack.c.l.b16 %v56
  %v163 = vunpack.c.h.b16 %v56
  %v164 = vunpack.c.l.b16 %v57
  %v165 = vunpack.c.h.b16 %v57
  %v166 = vunpack.c.l.b16 %v58
  %v167 = vunpack.c.h.b16 %v58
  %v168 = vunpack.c.l.b16 %v59
  %v169 = vunpack.c.h.b16 %v59
  %v170 = vunpack.c.l.b16 %v60
  %v171 = vunpack.c.h.b16 %v60
  %v172 = vunpack.c.l.b16 %v61
  %v173 = vunpack.c.h.b16 %v61
  %v174 = vunpack.c.l.b16 %v62
  %v175 = vunpack.c.h.b16 %v62
  %v176 = vunpack.c.l.b16 %v63
  %v177 = vunpack.c.h.b16 %v63
  %v178 = vunpack.c.l.b16 %v64
  %v179 = vunpack.c.h.b16 %v64
  %v180 = vunpack.c.l.b16 %v65
  %v181 = vunpack.c.h.b16 %v65
  %v182 = vunpack.c.l.b16 %v66
  %v183 = vunpack.c.h.b16 %v66
  %v184 = vunpack.c.l.b16 %v67
  %v185 = vunpack.c.h.b16 %v67
  %v186 = vpack.c.b16 %v124, %v122
  %v187 = vpack.c.b16 %v125, %v123
  %v188 = vpack.c.b16 %v128, %v126
  %v189 = vpack.c.b16 %v129, %v127
  %v190 = vpack.c.b16 %v132, %v130
  %v191 = vpack.c.b16 %v133, %v131
  %v192 = vpack.c.b16 %v136, %v134
  %v193 = vpack.c.b16 %v137, %v135
  %v194 = vpack.c.b16 %v140, %v138
  %v195 = vpack.c.b16 %v141, %v139
  %v196 = vpack.c.b16 %v144, %v142
  %v197 = vpack.c.b16 %v145, %v143
  %v198 = vpack.c.b16 %v148, %v146
  %v199 = vpack.c.b16 %v149, %v147
  %v200 = vpack.c.b16 %v152, %v150
  %v201 = vpack.c.b16 %v153, %v151
  %v202 = vpack.c.b16 %v156, %v154
  %v203 = vpack.c.b16 %v157, %v155
  %v204 = vpack.c.b16 %v160, %v158
  %v205 = vpack.c.b16 %v161, %v159
  %v206 = vpack.c.b16 %v164, %v162
  %v207 = vpack.c.b16 %v165, %v163
  %v208 = vpack.c.b16 %v168, %v166
  %v209 = vpack.c.b16 %v169, %v167
  %v210 = vpack.c.b16 %v172, %v170
  %v211 = vpack.c.b16 %v173, %v171
  %v212 = vpack.c.b16 %v176, %v174
  %v213 = vpack.c.b16 %v177, %v175
  %v214 = vpack.c.b16 %v180, %v178
  %v215 = vpack.c.b16 %v181, %v179
  %v216 = vpack.c.b16 %v184, %v182
  %v217 = vpack.c.b16 %v185, %v183
  %250 = vmatprep.subr.bf16.mxu0 %v187
  %251 = vmatpush1.bf16.msra.mxu0 %v186
  %252 = vmatprep.subr.bf16.mxu0 %v189
  %253 = vmatpush1.bf16.msra.mxu0 %v188
  %254 = vmatprep.subr.bf16.mxu0 %v191
  %255 = vmatpush1.bf16.msra.mxu0 %v190
  %256 = vmatprep.subr.bf16.mxu0 %v193
  %257 = vmatpush1.bf16.msra.mxu0 %v192
  %258 = vmatprep.subr.bf16.mxu0 %v195
  %259 = vmatpush1.bf16.msra.mxu0 %v194
  %260 = vmatprep.subr.bf16.mxu0 %v197
  %261 = vmatpush1.bf16.msra.mxu0 %v196
  %262 = vmatprep.subr.bf16.mxu0 %v199
  %263 = vmatpush1.bf16.msra.mxu0 %v198
  %264 = vmatprep.subr.bf16.mxu0 %v201
  %265 = vmatpush1.bf16.msra.mxu0 %v200
  %266 = vmatprep.subr.bf16.mxu0 %v203
  %267 = vmatpush1.bf16.msra.mxu0 %v202
  %268 = vmatprep.subr.bf16.mxu0 %v205
  %269 = vmatpush1.bf16.msra.mxu0 %v204
  %270 = vmatprep.subr.bf16.mxu0 %v207
  %271 = vmatpush1.bf16.msra.mxu0 %v206
  %272 = vmatprep.subr.bf16.mxu0 %v209
  %273 = vmatpush1.bf16.msra.mxu0 %v208
  %274 = vmatprep.subr.bf16.mxu0 %v211
  %275 = vmatpush1.bf16.msra.mxu0 %v210
  %276 = vmatprep.subr.bf16.mxu0 %v213
  %277 = vmatpush1.bf16.msra.mxu0 %v212
  %278 = vmatprep.subr.bf16.mxu0 %v215
  %279 = vmatpush1.bf16.msra.mxu0 %v214
  %280 = vmatprep.subr.bf16.mxu0 %v217
  %281 = vmatpush1.bf16.msra.mxu0 %v216
  %282 = vmatprep.mubr.bf16.mxu0 %v87
  %283 = vmatmul.mubr.bf16.gmra.mrb[0].mxu0 %v86
  %v284 = vpop.f32.mrb[0].mxu0
  %v285 = vadd.f32 %v73, %v284
  %v286 = vpop.f32.mrb[0].mxu0
  %v287 = vadd.f32 %v77, %v286
  %v288 = vpop.f32.mrb[0].mxu0
  %v289 = vadd.f32 %v73, %v288
  %v290 = vpop.f32.mrb[0].mxu0
  %v291 = vadd.f32 %v77, %v290
  %292 = vdwg.mxu0
  %v293 = vmax.f32 %v285, 0.0
  %v294 = vmax.f32 %v287, 0.0
  %v295 = vmax.f32 %v289, 0.0
  %v296 = vmax.f32 %v291, 0.0
  %v297 = vpack.c.bf16 %v295, %v293
  %v298 = vpack.c.bf16 %v296, %v294
  %v299 = vld [vmem:[#allocation2] sm:$0xff]
  %v300 = vld [vmem:[#allocation2 + $0x8] sm:$0xff]
  %v301 = vld [vmem:[#allocation2 + $0x10] sm:$0xff]
  %v302 = vld [vmem:[#allocation2 + $0x18] sm:$0xff]
  %v303 = vld [vmem:[%s3] sm:$0xff]
  %v304 = vld [vmem:[%s3 + $0x8] sm:$0xff]
  %v305 = vld [vmem:[%s3 + $0x10] sm:$0xff]
  %v306 = vld [vmem:[%s3 + $0x18] sm:$0xff]
  %v307 = vld [vmem:[%s3 + $0x20] sm:$0xff]
  %v308 = vld [vmem:[%s3 + $0x28] sm:$0xff]
  %v309 = vld [vmem:[%s3 + $0x30] sm:$0xff]
  %v310 = vld [vmem:[%s3 + $0x38] sm:$0xff]
  %v311 = vld [vmem:[%s3 + $0x40] sm:$0xff]
  %v312 = vld [vmem:[%s3 + $0x48] sm:$0xff]
  %v313 = vld [vmem:[%s3 + $0x50] sm:$0xff]
  %v314 = vld [vmem:[%s3 + $0x58] sm:$0xff]
  %v315 = vld [vmem:[%s3 + $0x60] sm:$0xff]
  %v316 = vld [vmem:[%s3 + $0x68] sm:$0xff]
  %v317 = vld [vmem:[%s3 + $0x70] sm:$0xff]
  %v318 = vld [vmem:[%s3 + $0x78] sm:$0xff]
  %v319 = vld [vmem:[%s3 + $0x80] sm:$0xff]
  %v320 = vld [vmem:[%s3 + $0x88] sm:$0xff]
  %v321 = vld [vmem:[%s3 + $0x90] sm:$0xff]
  %v322 = vld [vmem:[%s3 + $0x98] sm:$0xff]
  %v323 = vld [vmem:[%s3 + $0xa0] sm:$0xff]
  %v324 = vld [vmem:[%s3 + $0xa8] sm:$0xff]
  %v325 = vld [vmem:[%s3 + $0xb0] sm:$0xff]
  %v326 = vld [vmem:[%s3 + $0xb8] sm:$0xff]
  %v327 = vld [vmem:[%s3 + $0xc0] sm:$0xff]
  %v328 = vld [vmem:[%s3 + $0xc8] sm:$0xff]
  %v329 = vld [vmem:[%s3 + $0xd0] sm:$0xff]
  %v330 = vld [vmem:[%s3 + $0xd8] sm:$0xff]
  %v331 = vld [vmem:[%s3 + $0xe0] sm:$0xff]
  %v332 = vld [vmem:[%s3 + $0xe8] sm:$0xff]
  %v333 = vld [vmem:[%s3 + $0xf0] sm:$0xff]
  %v334 = vld [vmem:[%s3 + $0xf8] sm:$0xff]
  %v367 = vunpack.c.l.b16 %v303
  %v368 = vunpack.c.h.b16 %v303
  %v369 = vunpack.c.l.b16 %v304
  %v370 = vunpack.c.h.b16 %v304
  %v371 = vunpack.c.l.b16 %v305
  %v372 = vunpack.c.h.b16 %v305
  %v373 = vunpack.c.l.b16 %v306
  %v374 = vunpack.c.h.b16 %v306
  %v375 = vunpack.c.l.b16 %v307
  %v376 = vunpack.c.h.b16 %v307
  %v377 = vunpack.c.l.b16 %v308
  %v378 = vunpack.c.h.b16 %v308
  %v379 = vunpack.c.l.b16 %v309
  %v380 = vunpack.c.h.b16 %v309
  %v381 = vunpack.c.l.b16 %v310
  %v382 = vunpack.c.h.b16 %v310
  %v383 = vunpack.c.l.b16 %v311
  %v384 = vunpack.c.h.b16 %v311
  %v385 = vunpack.c.l.b16 %v312
  %v386 = vunpack.c.h.b16 %v312
  %v387 = vunpack.c.l.b16 %v313
  %v388 = vunpack.c.h.b16 %v313
  %v389 = vunpack.c.l.b16 %v314
  %v390 = vunpack.c.h.b16 %v314
  %v391 = vunpack.c.l.b16 %v315
  %v392 = vunpack.c.h.b16 %v315
  %v393 = vunpack.c.l.b16 %v316
  %v394 = vunpack.c.h.b16 %v316
  %v395 = vunpack.c.l.b16 %v317
  %v396 = vunpack.c.h.b16 %v317
  %v397 = vunpack.c.l.b16 %v318
  %v398 = vunpack.c.h.b16 %v318
  %v399 = vunpack.c.l.b16 %v319
  %v400 = vunpack.c.h.b16 %v319
  %v401 = vunpack.c.l.b16 %v320
  %v402 = vunpack.c.h.b16 %v320
  %v403 = vunpack.c.l.b16 %v321
  %v404 = vunpack.c.h.b16 %v321
  %v405 = vunpack.c.l.b16 %v322
  %v406 = vunpack.c.h.b16 %v322
  %v407 = vunpack.c.l.b16 %v323
  %v408 = vunpack.c.h.b16 %v323
  %v409 = vunpack.c.l.b16 %v324
  %v410 = vunpack.c.h.b16 %v324
  %v411 = vunpack.c.l.b16 %v325
  %v412 = vunpack.c.h.b16 %v325
  %v413 = vunpack.c.l.b16 %v326
  %v414 = vunpack.c.h.b16 %v326
  %v415 = vunpack.c.l.b16 %v327
  %v416 = vunpack.c.h.b16 %v327
  %v417 = vunpack.c.l.b16 %v328
  %v418 = vunpack.c.h.b16 %v328
  %v419 = vunpack.c.l.b16 %v329
  %v420 = vunpack.c.h.b16 %v329
  %v421 = vunpack.c.l.b16 %v330
  %v422 = vunpack.c.h.b16 %v330
  %v423 = vunpack.c.l.b16 %v331
  %v424 = vunpack.c.h.b16 %v331
  %v425 = vunpack.c.l.b16 %v332
  %v426 = vunpack.c.h.b16 %v332
  %v427 = vunpack.c.l.b16 %v333
  %v428 = vunpack.c.h.b16 %v333
  %v429 = vunpack.c.l.b16 %v334
  %v430 = vunpack.c.h.b16 %v334
  %v431 = vpack.c.b16 %v369, %v367
  %v432 = vpack.c.b16 %v370, %v368
  %v433 = vpack.c.b16 %v373, %v371
  %v434 = vpack.c.b16 %v374, %v372
  %v435 = vpack.c.b16 %v377, %v375
  %v436 = vpack.c.b16 %v378, %v376
  %v437 = vpack.c.b16 %v381, %v379
  %v438 = vpack.c.b16 %v382, %v380
  %v439 = vpack.c.b16 %v385, %v383
  %v440 = vpack.c.b16 %v386, %v384
  %v441 = vpack.c.b16 %v389, %v387
  %v442 = vpack.c.b16 %v390, %v388
  %v443 = vpack.c.b16 %v393, %v391
  %v444 = vpack.c.b16 %v394, %v392
  %v445 = vpack.c.b16 %v397, %v395
  %v446 = vpack.c.b16 %v398, %v396
  %v447 = vpack.c.b16 %v401, %v399
  %v448 = vpack.c.b16 %v402, %v400
  %v449 = vpack.c.b16 %v405, %v403
  %v450 = vpack.c.b16 %v406, %v404
  %v451 = vpack.c.b16 %v409, %v407
  %v452 = vpack.c.b16 %v410, %v408
  %v453 = vpack.c.b16 %v413, %v411
  %v454 = vpack.c.b16 %v414, %v412
  %v455 = vpack.c.b16 %v417, %v415
  %v456 = vpack.c.b16 %v418, %v416
  %v457 = vpack.c.b16 %v421, %v419
  %v458 = vpack.c.b16 %v422, %v420
  %v459 = vpack.c.b16 %v425, %v423
  %v460 = vpack.c.b16 %v426, %v424
  %v461 = vpack.c.b16 %v429, %v427
  %v462 = vpack.c.b16 %v430, %v428
  %495 = vmatprep.subr.bf16.mxu0 %v432
  %496 = vmatpush1.bf16.msra.mxu0 %v431
  %497 = vmatprep.subr.bf16.mxu0 %v434
  %498 = vmatpush1.bf16.msra.mxu0 %v433
  %499 = vmatprep.subr.bf16.mxu0 %v436
  %500 = vmatpush1.bf16.msra.mxu0 %v435
  %501 = vmatprep.subr.bf16.mxu0 %v438
  %502 = vmatpush1.bf16.msra.mxu0 %v437
  %503 = vmatprep.subr.bf16.mxu0 %v440
  %504 = vmatpush1.bf16.msra.mxu0 %v439
  %505 = vmatprep.subr.bf16.mxu0 %v442
  %506 = vmatpush1.bf16.msra.mxu0 %v441
  %507 = vmatprep.subr.bf16.mxu0 %v444
  %508 = vmatpush1.bf16.msra.mxu0 %v443
  %509 = vmatprep.subr.bf16.mxu0 %v446
  %510 = vmatpush1.bf16.msra.mxu0 %v445
  %511 = vmatprep.subr.bf16.mxu0 %v448
  %512 = vmatpush1.bf16.msra.mxu0 %v447
  %513 = vmatprep.subr.bf16.mxu0 %v450
  %514 = vmatpush1.bf16.msra.mxu0 %v449
  %515 = vmatprep.subr.bf16.mxu0 %v452
  %516 = vmatpush1.bf16.msra.mxu0 %v451
  %517 = vmatprep.subr.bf16.mxu0 %v454
  %518 = vmatpush1.bf16.msra.mxu0 %v453
  %519 = vmatprep.subr.bf16.mxu0 %v456
  %520 = vmatpush1.bf16.msra.mxu0 %v455
  %521 = vmatprep.subr.bf16.mxu0 %v458
  %522 = vmatpush1.bf16.msra.mxu0 %v457
  %523 = vmatprep.subr.bf16.mxu0 %v460
  %524 = vmatpush1.bf16.msra.mxu0 %v459
  %525 = vmatprep.subr.bf16.mxu0 %v462
  %526 = vmatpush1.bf16.msra.mxu0 %v461
  %527 = vmatprep.mubr.bf16.mxu0 %v298
  %528 = vmatmul.mubr.bf16.gmra.mrb[0].mxu0 %v297
  %v529 = vpop.f32.mrb[0].mxu0
  %v530 = vadd.f32 0.0, %v529
  %v531 = vpop.f32.mrb[0].mxu0
  %v532 = vadd.f32 0.0, %v531
  %v533 = vpop.f32.mrb[0].mxu0
  %v534 = vadd.f32 0.0, %v533
  %v535 = vpop.f32.mrb[0].mxu0
  %v536 = vadd.f32 0.0, %v535
  %537 = vdwg.mxu0
  %v538 = vadd.f32 %v299, %v530
  %v539 = vadd.f32 %v300, %v532
  %v540 = vadd.f32 %v301, %v534
  %v541 = vadd.f32 %v302, %v536
  %542 = vst [vmem:[#allocation2] sm:$0xff] %v538
  %543 = vst [vmem:[#allocation2 + $0x8] sm:$0xff] %v539
  %544 = vst [vmem:[#allocation2 + $0x10] sm:$0xff] %v540
  %545 = vst [vmem:[#allocation2 + $0x18] sm:$0xff] %v541
  // Predicated region
  $region34: #{_lambda_.1} parent=0 // pred_check
    %p546 = pneg %p26
  $region35: #{_lambda_.1} parent=0 // pred_check_branch
    %548 = sbr.rel (%p546) target = $region37
  $region36: #{_lambda_.1} parent=0 // pred_region
    %v549 = vld [vmem:[#allocation2] sm:$0xff]
    %v550 = vld [vmem:[#allocation2 + $0x8] sm:$0xff]
    %v551 = vld [vmem:[#allocation2 + $0x10] sm:$0xff]
    %v552 = vld [vmem:[#allocation2 + $0x18] sm:$0xff]
    %v553 = vld [vmem:[%s4] sm:$0x3]
    %v555 = vlaneseq
    %v556 = vshrl.u32 %v555, 7
    %v557 = vsub.s32 0, %v556
    %v558 = vrot.slane %v553, %v557
    %v559 = vlaneseq
    %v560 = vshrl.u32 %v559, 7
    %v561 = vsub.s32 1, %v560
    %v562 = vrot.slane %v553, %v561
    %v565 = vadd.f32 %v549, %v558
    %v566 = vadd.f32 %v550, %v562
    %v567 = vadd.f32 %v551, %v558
    %v568 = vadd.f32 %v552, %v562
    %v569 = vadd.f32 %v565, %v566
    %570 = vadd.xlane.f32.xlu0 %v569
    %v571 = vpop.xlane.xlu0 %570
    %v572 = vadd.f32 %v567, %v568
    %573 = vadd.xlane.f32.xlu0 %v572
    %v574 = vpop.xlane.xlu0 %573
    %v575 = vmul.f32 %v571, 0.0625
    %v576 = vmul.f32 %v574, 0.0625
    %v577 = vmul.f32 %v565, %v565
    %v578 = vmul.f32 %v566, %v566
    %v579 = vmul.f32 %v567, %v567
    %v580 = vmul.f32 %v568, %v568
    %v581 = vadd.f32 %v577, %v578
    %582 = vadd.xlane.f32.xlu0 %v581
    %v583 = vpop.xlane.xlu0 %582
    %v584 = vadd.f32 %v579, %v580
    %585 = vadd.xlane.f32.xlu0 %v584
    %v586 = vpop.xlane.xlu0 %585
    %v587 = vmul.f32 %v583, 0.0625
    %v588 = vmul.f32 %v586, 0.0625
    %v589 = vmul.f32 %v575, %v575
    %v590 = vmul.f32 %v576, %v576
    %v591 = vsub.f32 %v587, %v589
    %v592 = vsub.f32 %v588, %v590
    %v593 = vmax.f32 %v591, 0.0
    %v594 = vmax.f32 %v592, 0.0
    %v595 = vsub.f32 %v565, %v575
    %v596 = vsub.f32 %v566, %v575
    %v597 = vsub.f32 %v567, %v576
    %v598 = vsub.f32 %v568, %v576
    %v599 = vadd.f32 %v593, 1e-05
    %v600 = vadd.f32 %v594, 1e-05
    %v601 = vrsqrt.pop %v599
    %v602 = vrsqrt.pop %v600
    %v603 = vmul.f32 %v595, %v601
    %v604 = vmul.f32 %v596, %v601
    %v605 = vmul.f32 %v597, %v602
    %v606 = vmul.f32 %v598, %v602
    %v607 = vld [vmem:[%s5] sm:$0x3]
    %v609 = vlaneseq
    %v610 = vshrl.u32 %v609, 7
    %v611 = vsub.s32 0, %v610
    %v612 = vrot.slane %v607, %v611
    %v613 = vlaneseq
    %v614 = vshrl.u32 %v613, 7
    %v615 = vsub.s32 1, %v614
    %v616 = vrot.slane %v607, %v615
    %v619 = vmul.f32 %v603, %v612
    %v620 = vmul.f32 %v604, %v616
    %v621 = vmul.f32 %v605, %v612
    %v622 = vmul.f32 %v606, %v616
    %v623 = vld [vmem:[%s6] sm:$0x3]
    %v625 = vlaneseq
    %v626 = vshrl.u32 %v625, 7
    %v627 = vsub.s32 0, %v626
    %v628 = vrot.slane %v623, %v627
    %v629 = vlaneseq
    %v630 = vshrl.u32 %v629, 7
    %v631 = vsub.s32 1, %v630
    %v632 = vrot.slane %v623, %v631
    %v635 = vadd.f32 %v619, %v628
    %v636 = vadd.f32 %v620, %v632
    %v637 = vadd.f32 %v621, %v628
    %v638 = vadd.f32 %v622, %v632
    %v639 = vadd.f32 %v565, %v635
    %v640 = vadd.f32 %v566, %v636
    %v641 = vadd.f32 %v567, %v637
    %v642 = vadd.f32 %v568, %v638
    %v643 = vpack.c.bf16 %v641, %v639
    %v644 = vpack.c.bf16 %v642, %v640
    %v647 = vunpack.c.l.b16 %v643
    %v648 = vunpack.c.l.b16 %v644
    %v649 = vunpack.c.h.b16 %v643
    %v650 = vunpack.c.h.b16 %v644
    %v651 = vpack.c.b16 %v648, %v647
    %v652 = vpack.c.b16 %v650, %v649
    %655 = vst [vmem:[%s7] sm:$0xff] %v651
    %656 = vst [vmem:[%s7 + $0x8] sm:$0xff] %v652
  $region37: #{_lambda_.1} parent=0 // pred_fallthru
    _
  // Predicated region
  $region38: #{_lambda_.1} parent=0 // pred_check
    _
  $region39: #{_lambda_.1} parent=0 // pred_check_branch
    %658 = sbr.rel (0) target = $region41
  $region40: #{_lambda_.1} parent=0 // pred_region
    _
  $region41: #{_lambda_.1} parent=0 // pred_fallthru
    _
  // Predicated region
  $region42: #{_lambda_.1} parent=0 // pred_check
    _
  $region43: #{_lambda_.1} parent=0 // pred_check_branch
    %660 = sbr.rel (0) target = $region45
  $region44: #{_lambda_.1} parent=0 // pred_region
    _
  $region45: #{_lambda_.1} parent=0 // pred_fallthru
    _

// kernel: _lambda_.1
$region0: #{_lambda_.1}
  #allocation0 [shape = 'u32[]', space=smem, size = 0x4, offset = 0x4, fixed_abs, tag = 'smem constant byte address 0x4 - core index']
  #allocation1 [shape = 'u32[144,128]{1,0:T(1,128)}', space=vmem, size = 0x12000, scoped, tag = 'internal scratch']
  #allocation2 [shape = 'f32[16,256]{1,0:T(8,128)}', space=vmem, size = 0x4000, scoped, tag = 'scratch operand']
  %s0 = inlined_call_operand.vmem [shape: bf16[16,256], index: 0, kind: input, shape index: {}]
  %s1 = inlined_call_operand.vmem [shape: bf16[256,256], index: 1, kind: input, shape index: {}]
  %s2 = inlined_call_operand.vmem [shape: f32[1,256], index: 2, kind: input, shape index: {}]
  %s3 = inlined_call_operand.vmem [shape: bf16[256,256], index: 3, kind: input, shape index: {}]
  %s4 = inlined_call_operand.vmem [shape: f32[1,256], index: 4, kind: input, shape index: {}]
  %s5 = inlined_call_operand.vmem [shape: f32[1,256], index: 5, kind: input, shape index: {}]
  %s6 = inlined_call_operand.vmem [shape: f32[1,256], index: 6, kind: input, shape index: {}]
  %s7 = inlined_call_operand.vmem [shape: bf16[16,256], index: 7, kind: output, shape index: {}]
  %s8 = sld [smem:[#allocation0]]
  $region46: #{_lambda_.1} parent=0
    _
  %s10 = ssub.s32 1, %s8
  %s11 = scalar_select 0, %s10, %s8
  // Predicated region
  $region2: #{_lambda_.1} parent=0 // pred_check
    _
  $region3: #{_lambda_.1} parent=0 // pred_check_branch
    %13 = sbr.rel (0) target = $region5
  $region4: #{_lambda_.1} parent=0 // pred_region
    _
  $region5: #{_lambda_.1} parent=0 // pred_fallthru
    _
  // Predicated region
  $region6: #{_lambda_.1} parent=0 // pred_check
    _
  $region7: #{_lambda_.1} parent=0 // pred_check_branch
    %15 = sbr.rel (0) target = $region9
  $region8: #{_lambda_.1} parent=0 // pred_region
    _
  $region9: #{_lambda_.1} parent=0 // pred_fallthru
    _
  // Predicated region
  $region10: #{_lambda_.1} parent=0 // pred_check
    _
  $region11: #{_lambda_.1} parent=0 // pred_check_branch
    %17 = sbr.rel (0) target = $region13
  $region12: #{_lambda_.1} parent=0 // pred_region
    _
  $region13: #{_lambda_.1} parent=0 // pred_fallthru
    _
  // Predicated region
  $region14: #{_lambda_.1} parent=0 // pred_check
    _
  $region15: #{_lambda_.1} parent=0 // pred_check_branch
    %19 = sbr.rel (0) target = $region17
  $region16: #{_lambda_.1} parent=0 // pred_region
    _
  $region17: #{_lambda_.1} parent=0 // pred_fallthru
    _
  // Predicated region
  $region18: #{_lambda_.1} parent=0 // pred_check
    _
  $region19: #{_lambda_.1} parent=0 // pred_check_branch
    %21 = sbr.rel (0) target = $region21
  $region20: #{_lambda_.1} parent=0 // pred_region
    _
  $region21: #{_lambda_.1} parent=0 // pred_fallthru
    _
  // Predicated region
  $region22: #{_lambda_.1} parent=0 // pred_check
    _
  $region23: #{_lambda_.1} parent=0 // pred_check_branch
    %23 = sbr.rel (0) target = $region25
  $region24: #{_lambda_.1} parent=0 // pred_region
    _
  $region25: #{_lambda_.1} parent=0 // pred_fallthru
    _
  // Predicated region
  $region26: #{_lambda_.1} parent=0 // pred_check
    _
  $region27: #{_lambda_.1} parent=0 // pred_check_branch
    %25 = sbr.rel (0) target = $region29
  $region28: #{_lambda_.1} parent=0 // pred_region
    _
  $region29: #{_lambda_.1} parent=0 // pred_fallthru
    _
  %p26 = scmp.eq.s32.totalorder 0, 0
  // Predicated region
  $region30: #{_lambda_.1} parent=0 // pred_check
    %p27 = pneg %p26
  $region31: #{_lambda_.1} parent=0 // pred_check_branch
    %29 = sbr.rel (%p27) target = $region33
  $region32: #{_lambda_.1} parent=0 // pred_region
    %30 = vst [vmem:[#allocation2] sm:$0xff] 0.0
    %31 = vst [vmem:[#allocation2 + $0x8] sm:$0xff] 0.0
    %32 = vst [vmem:[#allocation2 + $0x10] sm:$0xff] 0.0
    %33 = vst [vmem:[#allocation2 + $0x18] sm:$0xff] 0.0
  $region33: #{_lambda_.1} parent=0 // pred_fallthru
    _
  %v34 = vld [vmem:[%s0] sm:$0xff]
  %v35 = vld [vmem:[%s0 + $0x8] sm:$0xff]
  %v36 = vld [vmem:[%s1] sm:$0xff]
  %v37 = vld [vmem:[%s1 + $0x8] sm:$0xff]
  %v38 = vld [vmem:[%s1 + $0x10] sm:$0xff]
  %v39 = vld [vmem:[%s1 + $0x18] sm:$0xff]
  %v40 = vld [vmem:[%s1 + $0x20] sm:$0xff]
  %v41 = vld [vmem:[%s1 + $0x28] sm:$0xff]
  %v42 = vld [vmem:[%s1 + $0x30] sm:$0xff]
  %v43 = vld [vmem:[%s1 + $0x38] sm:$0xff]
  %v44 = vld [vmem:[%s1 + $0x40] sm:$0xff]
  %v45 = vld [vmem:[%s1 + $0x48] sm:$0xff]
  %v46 = vld [vmem:[%s1 + $0x50] sm:$0xff]
  %v47 = vld [vmem:[%s1 + $0x58] sm:$0xff]
  %v48 = vld [vmem:[%s1 + $0x60] sm:$0xff]
  %v49 = vld [vmem:[%s1 + $0x68] sm:$0xff]
  %v50 = vld [vmem:[%s1 + $0x70] sm:$0xff]
  %v51 = vld [vmem:[%s1 + $0x78] sm:$0xff]
  %v52 = vld [vmem:[%s1 + $0x80] sm:$0xff]
  %v53 = vld [vmem:[%s1 + $0x88] sm:$0xff]
  %v54 = vld [vmem:[%s1 + $0x90] sm:$0xff]
  %v55 = vld [vmem:[%s1 + $0x98] sm:$0xff]
  %v56 = vld [vmem:[%s1 + $0xa0] sm:$0xff]
  %v57 = vld [vmem:[%s1 + $0xa8] sm:$0xff]
  %v58 = vld [vmem:[%s1 + $0xb0] sm:$0xff]
  %v59 = vld [vmem:[%s1 + $0xb8] sm:$0xff]
  %v60 = vld [vmem:[%s1 + $0xc0] sm:$0xff]
  %v61 = vld [vmem:[%s1 + $0xc8] sm:$0xff]
  %v62 = vld [vmem:[%s1 + $0xd0] sm:$0xff]
  %v63 = vld [vmem:[%s1 + $0xd8] sm:$0xff]
  %v64 = vld [vmem:[%s1 + $0xe0] sm:$0xff]
  %v65 = vld [vmem:[%s1 + $0xe8] sm:$0xff]
  %v66 = vld [vmem:[%s1 + $0xf0] sm:$0xff]
  %v67 = vld [vmem:[%s1 + $0xf8] sm:$0xff]
  %v68 = vld [vmem:[%s2] sm:$0x3]
  %v70 = vlaneseq
  %v71 = vshrl.u32 %v70, 7
  %v72 = vsub.s32 0, %v71
  %v73 = vrot.slane %v68, %v72
  %v74 = vlaneseq
  %v75 = vshrl.u32 %v74, 7
  %v76 = vsub.s32 1, %v75
  %v77 = vrot.slane %v68, %v76
  %v82 = vunpack.c.l.b16 %v34
  %v83 = vunpack.c.h.b16 %v34
  %v84 = vunpack.c.l.b16 %v35
  %v85 = vunpack.c.h.b16 %v35
  %v86 = vpack.c.b16 %v84, %v82
  %v87 = vpack.c.b16 %v85, %v83
  %v122 = vunpack.c.l.b16 %v36
  %v123 = vunpack.c.h.b16 %v36
  %v124 = vunpack.c.l.b16 %v37
  %v125 = vunpack.c.h.b16 %v37
  %v126 = vunpack.c.l.b16 %v38
  %v127 = vunpack.c.h.b16 %v38
  %v128 = vunpack.c.l.b16 %v39
  %v129 = vunpack.c.h.b16 %v39
  %v130 = vunpack.c.l.b16 %v40
  %v131 = vunpack.c.h.b16 %v40
  %v132 = vunpack.c.l.b16 %v41
  %v133 = vunpack.c.h.b16 %v41
  %v134 = vunpack.c.l.b16 %v42
  %v135 = vunpack.c.h.b16 %v42
  %v136 = vunpack.c.l.b16 %v43
  %v137 = vunpack.c.h.b16 %v43
  %v138 = vunpack.c.l.b16 %v44
  %v139 = vunpack.c.h.b16 %v44
  %v140 = vunpack.c.l.b16 %v45
  %v141 = vunpack.c.h.b16 %v45
  %v142 = vunpack.c.l.b16 %v46
  %v143 = vunpack.c.h.b16 %v46
  %v144 = vunpack.c.l.b16 %v47
  %v145 = vunpack.c.h.b16 %v47
  %v146 = vunpack.c.l.b16 %v48
  %v147 = vunpack.c.h.b16 %v48
  %v148 = vunpack.c.l.b16 %v49
  %v149 = vunpack.c.h.b16 %v49
  %v150 = vunpack.c.l.b16 %v50
  %v151 = vunpack.c.h.b16 %v50
  %v152 = vunpack.c.l.b16 %v51
  %v153 = vunpack.c.h.b16 %v51
  %v154 = vunpack.c.l.b16 %v52
  %v155 = vunpack.c.h.b16 %v52
  %v156 = vunpack.c.l.b16 %v53
  %v157 = vunpack.c.h.b16 %v53
  %v158 = vunpack.c.l.b16 %v54
  %v159 = vunpack.c.h.b16 %v54
  %v160 = vunpack.c.l.b16 %v55
  %v161 = vunpack.c.h.b16 %v55
  %v162 = vunpack.c.l.b16 %v56
  %v163 = vunpack.c.h.b16 %v56
  %v164 = vunpack.c.l.b16 %v57
  %v165 = vunpack.c.h.b16 %v57
  %v166 = vunpack.c.l.b16 %v58
  %v167 = vunpack.c.h.b16 %v58
  %v168 = vunpack.c.l.b16 %v59
  %v169 = vunpack.c.h.b16 %v59
  %v170 = vunpack.c.l.b16 %v60
  %v171 = vunpack.c.h.b16 %v60
  %v172 = vunpack.c.l.b16 %v61
  %v173 = vunpack.c.h.b16 %v61
  %v174 = vunpack.c.l.b16 %v62
  %v175 = vunpack.c.h.b16 %v62
  %v176 = vunpack.c.l.b16 %v63
  %v177 = vunpack.c.h.b16 %v63
  %v178 = vunpack.c.l.b16 %v64
  %v179 = vunpack.c.h.b16 %v64
  %v180 = vunpack.c.l.b16 %v65
  %v181 = vunpack.c.h.b16 %v65
  %v182 = vunpack.c.l.b16 %v66
  %v183 = vunpack.c.h.b16 %v66
  %v184 = vunpack.c.l.b16 %v67
  %v185 = vunpack.c.h.b16 %v67
  %v186 = vpack.c.b16 %v124, %v122
  %v187 = vpack.c.b16 %v125, %v123
  %v188 = vpack.c.b16 %v128, %v126
  %v189 = vpack.c.b16 %v129, %v127
  %v190 = vpack.c.b16 %v132, %v130
  %v191 = vpack.c.b16 %v133, %v131
  %v192 = vpack.c.b16 %v136, %v134
  %v193 = vpack.c.b16 %v137, %v135
  %v194 = vpack.c.b16 %v140, %v138
  %v195 = vpack.c.b16 %v141, %v139
  %v196 = vpack.c.b16 %v144, %v142
  %v197 = vpack.c.b16 %v145, %v143
  %v198 = vpack.c.b16 %v148, %v146
  %v199 = vpack.c.b16 %v149, %v147
  %v200 = vpack.c.b16 %v152, %v150
  %v201 = vpack.c.b16 %v153, %v151
  %v202 = vpack.c.b16 %v156, %v154
  %v203 = vpack.c.b16 %v157, %v155
  %v204 = vpack.c.b16 %v160, %v158
  %v205 = vpack.c.b16 %v161, %v159
  %v206 = vpack.c.b16 %v164, %v162
  %v207 = vpack.c.b16 %v165, %v163
  %v208 = vpack.c.b16 %v168, %v166
  %v209 = vpack.c.b16 %v169, %v167
  %v210 = vpack.c.b16 %v172, %v170
  %v211 = vpack.c.b16 %v173, %v171
  %v212 = vpack.c.b16 %v176, %v174
  %v213 = vpack.c.b16 %v177, %v175
  %v214 = vpack.c.b16 %v180, %v178
  %v215 = vpack.c.b16 %v181, %v179
  %v216 = vpack.c.b16 %v184, %v182
  %v217 = vpack.c.b16 %v185, %v183
  %250 = vmatprep.subr.bf16.mxu0 %v187
  %251 = vmatpush1.bf16.msra.mxu0 %v186
  %252 = vmatprep.subr.bf16.mxu0 %v189
  %253 = vmatpush1.bf16.msra.mxu0 %v188
  %254 = vmatprep.subr.bf16.mxu0 %v191
  %255 = vmatpush1.bf16.msra.mxu0 %v190
  %256 = vmatprep.subr.bf16.mxu0 %v193
  %257 = vmatpush1.bf16.msra.mxu0 %v192
  %258 = vmatprep.subr.bf16.mxu0 %v195
  %259 = vmatpush1.bf16.msra.mxu0 %v194
  %260 = vmatprep.subr.bf16.mxu0 %v197
  %261 = vmatpush1.bf16.msra.mxu0 %v196
  %262 = vmatprep.subr.bf16.mxu0 %v199
  %263 = vmatpush1.bf16.msra.mxu0 %v198
  %264 = vmatprep.subr.bf16.mxu0 %v201
  %265 = vmatpush1.bf16.msra.mxu0 %v200
  %266 = vmatprep.subr.bf16.mxu0 %v203
  %267 = vmatpush1.bf16.msra.mxu0 %v202
  %268 = vmatprep.subr.bf16.mxu0 %v205
  %269 = vmatpush1.bf16.msra.mxu0 %v204
  %270 = vmatprep.subr.bf16.mxu0 %v207
  %271 = vmatpush1.bf16.msra.mxu0 %v206
  %272 = vmatprep.subr.bf16.mxu0 %v209
  %273 = vmatpush1.bf16.msra.mxu0 %v208
  %274 = vmatprep.subr.bf16.mxu0 %v211
  %275 = vmatpush1.bf16.msra.mxu0 %v210
  %276 = vmatprep.subr.bf16.mxu0 %v213
  %277 = vmatpush1.bf16.msra.mxu0 %v212
  %278 = vmatprep.subr.bf16.mxu0 %v215
  %279 = vmatpush1.bf16.msra.mxu0 %v214
  %280 = vmatprep.subr.bf16.mxu0 %v217
  %281 = vmatpush1.bf16.msra.mxu0 %v216
  %282 = vmatprep.mubr.bf16.mxu0 %v87
  %283 = vmatmul.mubr.bf16.gmra.mrb[0].mxu0 %v86
  %v284 = vpop.f32.mrb[0].mxu0
  %v285 = vadd.f32 %v73, %v284
  %v286 = vpop.f32.mrb[0].mxu0
  %v287 = vadd.f32 %v77, %v286
  %v288 = vpop.f32.mrb[0].mxu0
  %v289 = vadd.f32 %v73, %v288
  %v290 = vpop.f32.mrb[0].mxu0
  %v291 = vadd.f32 %v77, %v290
  %292 = vdwg.mxu0
  %v293 = vmax.f32 %v285, 0.0
  %v294 = vmax.f32 %v287, 0.0
  %v295 = vmax.f32 %v289, 0.0
  %v296 = vmax.f32 %v291, 0.0
  %v297 = vpack.c.bf16 %v295, %v293
  %v298 = vpack.c.bf16 %v296, %v294
  %v299 = vld [vmem:[#allocation2] sm:$0xff]
  %v300 = vld [vmem:[#allocation2 + $0x8] sm:$0xff]
  %v301 = vld [vmem:[#allocation2 + $0x10] sm:$0xff]
  %v302 = vld [vmem:[#allocation2 + $0x18] sm:$0xff]
  %v303 = vld [vmem:[%s3] sm:$0xff]
  %v304 = vld [vmem:[%s3 + $0x8] sm:$0xff]
  %v305 = vld [vmem:[%s3 + $0x10] sm:$0xff]
  %v306 = vld [vmem:[%s3 + $0x18] sm:$0xff]
  %v307 = vld [vmem:[%s3 + $0x20] sm:$0xff]
  %v308 = vld [vmem:[%s3 + $0x28] sm:$0xff]
  %v309 = vld [vmem:[%s3 + $0x30] sm:$0xff]
  %v310 = vld [vmem:[%s3 + $0x38] sm:$0xff]
  %v311 = vld [vmem:[%s3 + $0x40] sm:$0xff]
  %v312 = vld [vmem:[%s3 + $0x48] sm:$0xff]
  %v313 = vld [vmem:[%s3 + $0x50] sm:$0xff]
  %v314 = vld [vmem:[%s3 + $0x58] sm:$0xff]
  %v315 = vld [vmem:[%s3 + $0x60] sm:$0xff]
  %v316 = vld [vmem:[%s3 + $0x68] sm:$0xff]
  %v317 = vld [vmem:[%s3 + $0x70] sm:$0xff]
  %v318 = vld [vmem:[%s3 + $0x78] sm:$0xff]
  %v319 = vld [vmem:[%s3 + $0x80] sm:$0xff]
  %v320 = vld [vmem:[%s3 + $0x88] sm:$0xff]
  %v321 = vld [vmem:[%s3 + $0x90] sm:$0xff]
  %v322 = vld [vmem:[%s3 + $0x98] sm:$0xff]
  %v323 = vld [vmem:[%s3 + $0xa0] sm:$0xff]
  %v324 = vld [vmem:[%s3 + $0xa8] sm:$0xff]
  %v325 = vld [vmem:[%s3 + $0xb0] sm:$0xff]
  %v326 = vld [vmem:[%s3 + $0xb8] sm:$0xff]
  %v327 = vld [vmem:[%s3 + $0xc0] sm:$0xff]
  %v328 = vld [vmem:[%s3 + $0xc8] sm:$0xff]
  %v329 = vld [vmem:[%s3 + $0xd0] sm:$0xff]
  %v330 = vld [vmem:[%s3 + $0xd8] sm:$0xff]
  %v331 = vld [vmem:[%s3 + $0xe0] sm:$0xff]
  %v332 = vld [vmem:[%s3 + $0xe8] sm:$0xff]
  %v333 = vld [vmem:[%s3 + $0xf0] sm:$0xff]
  %v334 = vld [vmem:[%s3 + $0xf8] sm:$0xff]
  %v367 = vunpack.c.l.b16 %v303
  %v368 = vunpack.c.h.b16 %v303
  %v369 = vunpack.c.l.b16 %v304
  %v370 = vunpack.c.h.b16 %v304
  %v371 = vunpack.c.l.b16 %v305
  %v372 = vunpack.c.h.b16 %v305
  %v373 = vunpack.c.l.b16 %v306
  %v374 = vunpack.c.h.b16 %v306
  %v375 = vunpack.c.l.b16 %v307
  %v376 = vunpack.c.h.b16 %v307
  %v377 = vunpack.c.l.b16 %v308
  %v378 = vunpack.c.h.b16 %v308
  %v379 = vunpack.c.l.b16 %v309
  %v380 = vunpack.c.h.b16 %v309
  %v381 = vunpack.c.l.b16 %v310
  %v382 = vunpack.c.h.b16 %v310
  %v383 = vunpack.c.l.b16 %v311
  %v384 = vunpack.c.h.b16 %v311
  %v385 = vunpack.c.l.b16 %v312
  %v386 = vunpack.c.h.b16 %v312
  %v387 = vunpack.c.l.b16 %v313
  %v388 = vunpack.c.h.b16 %v313
  %v389 = vunpack.c.l.b16 %v314
  %v390 = vunpack.c.h.b16 %v314
  %v391 = vunpack.c.l.b16 %v315
  %v392 = vunpack.c.h.b16 %v315
  %v393 = vunpack.c.l.b16 %v316
  %v394 = vunpack.c.h.b16 %v316
  %v395 = vunpack.c.l.b16 %v317
  %v396 = vunpack.c.h.b16 %v317
  %v397 = vunpack.c.l.b16 %v318
  %v398 = vunpack.c.h.b16 %v318
  %v399 = vunpack.c.l.b16 %v319
  %v400 = vunpack.c.h.b16 %v319
  %v401 = vunpack.c.l.b16 %v320
  %v402 = vunpack.c.h.b16 %v320
  %v403 = vunpack.c.l.b16 %v321
  %v404 = vunpack.c.h.b16 %v321
  %v405 = vunpack.c.l.b16 %v322
  %v406 = vunpack.c.h.b16 %v322
  %v407 = vunpack.c.l.b16 %v323
  %v408 = vunpack.c.h.b16 %v323
  %v409 = vunpack.c.l.b16 %v324
  %v410 = vunpack.c.h.b16 %v324
  %v411 = vunpack.c.l.b16 %v325
  %v412 = vunpack.c.h.b16 %v325
  %v413 = vunpack.c.l.b16 %v326
  %v414 = vunpack.c.h.b16 %v326
  %v415 = vunpack.c.l.b16 %v327
  %v416 = vunpack.c.h.b16 %v327
  %v417 = vunpack.c.l.b16 %v328
  %v418 = vunpack.c.h.b16 %v328
  %v419 = vunpack.c.l.b16 %v329
  %v420 = vunpack.c.h.b16 %v329
  %v421 = vunpack.c.l.b16 %v330
  %v422 = vunpack.c.h.b16 %v330
  %v423 = vunpack.c.l.b16 %v331
  %v424 = vunpack.c.h.b16 %v331
  %v425 = vunpack.c.l.b16 %v332
  %v426 = vunpack.c.h.b16 %v332
  %v427 = vunpack.c.l.b16 %v333
  %v428 = vunpack.c.h.b16 %v333
  %v429 = vunpack.c.l.b16 %v334
  %v430 = vunpack.c.h.b16 %v334
  %v431 = vpack.c.b16 %v369, %v367
  %v432 = vpack.c.b16 %v370, %v368
  %v433 = vpack.c.b16 %v373, %v371
  %v434 = vpack.c.b16 %v374, %v372
  %v435 = vpack.c.b16 %v377, %v375
  %v436 = vpack.c.b16 %v378, %v376
  %v437 = vpack.c.b16 %v381, %v379
  %v438 = vpack.c.b16 %v382, %v380
  %v439 = vpack.c.b16 %v385, %v383
  %v440 = vpack.c.b16 %v386, %v384
  %v441 = vpack.c.b16 %v389, %v387
  %v442 = vpack.c.b16 %v390, %v388
  %v443 = vpack.c.b16 %v393, %v391
  %v444 = vpack.c.b16 %v394, %v392
  %v445 = vpack.c.b16 %v397, %v395
  %v446 = vpack.c.b16 %v398, %v396
  %v447 = vpack.c.b16 %v401, %v399
  %v448 = vpack.c.b16 %v402, %v400
  %v449 = vpack.c.b16 %v405, %v403
  %v450 = vpack.c.b16 %v406, %v404
  %v451 = vpack.c.b16 %v409, %v407
  %v452 = vpack.c.b16 %v410, %v408
  %v453 = vpack.c.b16 %v413, %v411
  %v454 = vpack.c.b16 %v414, %v412
  %v455 = vpack.c.b16 %v417, %v415
  %v456 = vpack.c.b16 %v418, %v416
  %v457 = vpack.c.b16 %v421, %v419
  %v458 = vpack.c.b16 %v422, %v420
  %v459 = vpack.c.b16 %v425, %v423
  %v460 = vpack.c.b16 %v426, %v424
  %v461 = vpack.c.b16 %v429, %v427
  %v462 = vpack.c.b16 %v430, %v428
  %495 = vmatprep.subr.bf16.mxu0 %v432
  %496 = vmatpush1.bf16.msra.mxu0 %v431
  %497 = vmatprep.subr.bf16.mxu0 %v434
  %498 = vmatpush1.bf16.msra.mxu0 %v433
  %499 = vmatprep.subr.bf16.mxu0 %v436
  %500 = vmatpush1.bf16.msra.mxu0 %v435
  %501 = vmatprep.subr.bf16.mxu0 %v438
  %502 = vmatpush1.bf16.msra.mxu0 %v437
  %503 = vmatprep.subr.bf16.mxu0 %v440
  %504 = vmatpush1.bf16.msra.mxu0 %v439
  %505 = vmatprep.subr.bf16.mxu0 %v442
  %506 = vmatpush1.bf16.msra.mxu0 %v441
  %507 = vmatprep.subr.bf16.mxu0 %v444
  %508 = vmatpush1.bf16.msra.mxu0 %v443
  %509 = vmatprep.subr.bf16.mxu0 %v446
  %510 = vmatpush1.bf16.msra.mxu0 %v445
  %511 = vmatprep.subr.bf16.mxu0 %v448
  %512 = vmatpush1.bf16.msra.mxu0 %v447
  %513 = vmatprep.subr.bf16.mxu0 %v450
  %514 = vmatpush1.bf16.msra.mxu0 %v449
  %515 = vmatprep.subr.bf16.mxu0 %v452
  %516 = vmatpush1.bf16.msra.mxu0 %v451
  %517 = vmatprep.subr.bf16.mxu0 %v454
  %518 = vmatpush1.bf16.msra.mxu0 %v453
  %519 = vmatprep.subr.bf16.mxu0 %v456
  %520 = vmatpush1.bf16.msra.mxu0 %v455
  %521 = vmatprep.subr.bf16.mxu0 %v458
  %522 = vmatpush1.bf16.msra.mxu0 %v457
  %523 = vmatprep.subr.bf16.mxu0 %v460
  %524 = vmatpush1.bf16.msra.mxu0 %v459
  %525 = vmatprep.subr.bf16.mxu0 %v462
  %526 = vmatpush1.bf16.msra.mxu0 %v461
  %527 = vmatprep.mubr.bf16.mxu0 %v298
  %528 = vmatmul.mubr.bf16.gmra.mrb[0].mxu0 %v297
  %v529 = vpop.f32.mrb[0].mxu0
  %v530 = vadd.f32 0.0, %v529
  %v531 = vpop.f32.mrb[0].mxu0
  %v532 = vadd.f32 0.0, %v531
  %v533 = vpop.f32.mrb[0].mxu0
  %v534 = vadd.f32 0.0, %v533
  %v535 = vpop.f32.mrb[0].mxu0
  %v536 = vadd.f32 0.0, %v535
  %537 = vdwg.mxu0
  %v538 = vadd.f32 %v299, %v530
  %v539 = vadd.f32 %v300, %v532
  %v540 = vadd.f32 %v301, %v534
  %v541 = vadd.f32 %v302, %v536
  %542 = vst [vmem:[#allocation2] sm:$0xff] %v538
  %543 = vst [vmem:[#allocation2 + $0x8] sm:$0xff] %v539
  %544 = vst [vmem:[#allocation2 + $0x10] sm:$0xff] %v540
  %545 = vst [vmem:[#allocation2 + $0x18] sm:$0xff] %v541
  // Predicated region
  $region34: #{_lambda_.1} parent=0 // pred_check
    %p546 = pneg %p26
  $region35: #{_lambda_.1} parent=0 // pred_check_branch
    %548 = sbr.rel (%p546) target = $region37
  $region36: #{_lambda_.1} parent=0 // pred_region
    %v549 = vld [vmem:[#allocation2] sm:$0xff]
    %v550 = vld [vmem:[#allocation2 + $0x8] sm:$0xff]
    %v551 = vld [vmem:[#allocation2 + $0x10] sm:$0xff]
    %v552 = vld [vmem:[#allocation2 + $0x18] sm:$0xff]
    %v553 = vld [vmem:[%s4] sm:$0x3]
    %v555 = vlaneseq
    %v556 = vshrl.u32 %v555, 7
    %v557 = vsub.s32 0, %v556
    %v558 = vrot.slane %v553, %v557
    %v559 = vlaneseq
    %v560 = vshrl.u32 %v559, 7
    %v561 = vsub.s32 1, %v560
    %v562 = vrot.slane %v553, %v561
    %v565 = vadd.f32 %v549, %v558
    %v566 = vadd.f32 %v550, %v562
    %v567 = vadd.f32 %v551, %v558
    %v568 = vadd.f32 %v552, %v562
    %v569 = vadd.f32 %v565, %v566
    %570 = vadd.xlane.f32.xlu0 %v569
    %v571 = vpop.xlane.xlu0 %570
    %v572 = vadd.f32 %v567, %v568
    %573 = vadd.xlane.f32.xlu0 %v572
    %v574 = vpop.xlane.xlu0 %573
    %v575 = vmul.f32 %v571, 0.0625
    %v576 = vmul.f32 %v574, 0.0625
    %v577 = vmul.f32 %v565, %v565
    %v578 = vmul.f32 %v566, %v566
    %v579 = vmul.f32 %v567, %v567
    %v580 = vmul.f32 %v568, %v568
    %v581 = vadd.f32 %v577, %v578
    %582 = vadd.xlane.f32.xlu0 %v581
    %v583 = vpop.xlane.xlu0 %582
    %v584 = vadd.f32 %v579, %v580
    %585 = vadd.xlane.f32.xlu0 %v584
    %v586 = vpop.xlane.xlu0 %585
    %v587 = vmul.f32 %v583, 0.0625
    %v588 = vmul.f32 %v586, 0.0625
    %v589 = vmul.f32 %v575, %v575
    %v590 = vmul.f32 %v576, %v576
    %v591 = vsub.f32 %v587, %v589
    %v592 = vsub.f32 %v588, %v590
    %v593 = vmax.f32 %v591, 0.0
    %v594 = vmax.f32 %v592, 0.0
    %v595 = vsub.f32 %v565, %v575
    %v596 = vsub.f32 %v566, %v575
    %v597 = vsub.f32 %v567, %v576
    %v598 = vsub.f32 %v568, %v576
    %v599 = vadd.f32 %v593, 1e-05
    %v600 = vadd.f32 %v594, 1e-05
    %v601 = vrsqrt.pop %v599
    %v602 = vrsqrt.pop %v600
    %v603 = vmul.f32 %v595, %v601
    %v604 = vmul.f32 %v596, %v601
    %v605 = vmul.f32 %v597, %v602
    %v606 = vmul.f32 %v598, %v602
    %v607 = vld [vmem:[%s5] sm:$0x3]
    %v609 = vlaneseq
    %v610 = vshrl.u32 %v609, 7
    %v611 = vsub.s32 0, %v610
    %v612 = vrot.slane %v607, %v611
    %v613 = vlaneseq
    %v614 = vshrl.u32 %v613, 7
    %v615 = vsub.s32 1, %v614
    %v616 = vrot.slane %v607, %v615
    %v619 = vmul.f32 %v603, %v612
    %v620 = vmul.f32 %v604, %v616
    %v621 = vmul.f32 %v605, %v612
    %v622 = vmul.f32 %v606, %v616
    %v623 = vld [vmem:[%s6] sm:$0x3]
    %v625 = vlaneseq
    %v626 = vshrl.u32 %v625, 7
    %v627 = vsub.s32 0, %v626
    %v628 = vrot.slane %v623, %v627
    %v629 = vlaneseq
    %v630 = vshrl.u32 %v629, 7
    %v631 = vsub.s32 1, %v630
    %v632 = vrot.slane %v623, %v631
    %v635 = vadd.f32 %v619, %v628
    %v636 = vadd.f32 %v620, %v632
    %v637 = vadd.f32 %v621, %v628
    %v638 = vadd.f32 %v622, %v632
    %v639 = vadd.f32 %v565, %v635
    %v640 = vadd.f32 %v566, %v636
    %v641 = vadd.f32 %v567, %v637
    %v642 = vadd.f32 %v568, %v638
    %v643 = vpack.c.bf16 %v641, %v639
    %v644 = vpack.c.bf16 %v642, %v640
    %v647 = vunpack.c.l.b16 %v643
    %v648 = vunpack.c.l.b16 %v644
    %v649 = vunpack.c.h.b16 %v643
    %v650 = vunpack.c.h.b16 %v644
    %v651 = vpack.c.b16 %v648, %v647
    %v652 = vpack.c.b16 %v650, %v649
    %655 = vst [vmem:[%s7] sm:$0xff] %v651
    %656 = vst [vmem:[%s7 + $0x8] sm:$0xff] %v652
  $region37: #{_lambda_.1} parent=0 // pred_fallthru
    _
  // Predicated region
  $region38: #{_lambda_.1} parent=0 // pred_check
    _
  $region39: #{_lambda_.1} parent=0 // pred_check_branch
    %658 = sbr.rel (0) target = $region41
  $region40: #{_lambda_.1} parent=0 // pred_region
    _
  $region41: #{_lambda_.1} parent=0 // pred_fallthru
    _
  // Predicated region
  $region42: #{_lambda_.1} parent=0 // pred_check
    _
  $region43: #{_lambda_.1} parent=0 // pred_check_branch
    %660 = sbr.rel (0) target = $region45
  $region44: #{_lambda_.1} parent=0 // pred_region
    _
  $region45: #{_lambda_.1} parent=0 // pred_fallthru
    _

</llo_original>
